<compile_context>
chip_gen: v7x
topology: tpu7x:2x2x1
jax: 0.10.0
libtpu: 0.0.40
codegen_flags: <defaults>
</compile_context>

<pallas_src>
import jax
import jax.numpy as jnp
from jax import lax
from jax.experimental import pallas as pl
from jax.experimental.pallas import tpu as pltpu


def _round_up(a, b):
    return (a + b - 1) // b * b


def _cdiv(a, b):
    return (a + b - 1) // b


# --------------------------------------------------------------------------- #
# Kernel bodies
# --------------------------------------------------------------------------- #
def _rff_kernel_resident(x_ref, w1_ref, b1_ref, w2_ref, b2_ref, g_ref, beta_ref,
                         o_ref):
    """Whole (D, D) bf16 weights resident in VMEM; one row tile per grid step."""
    x = x_ref[...].astype(jnp.float32)          # f32 copy kept for the residual
    x_bf = x.astype(jnp.bfloat16)

    # linear1 + ReLU  (weights pre-transposed to (in, out), pre-cast to bf16)
    h = jnp.dot(x_bf, w1_ref[...], preferred_element_type=jnp.float32)
    h = jnp.maximum(h + b1_ref[...], 0.0)

    # TODO(synk): dropout1/dropout2 are identity (eval mode); training-mode
    # masks would use pltpu.prng_seed + pltpu.stateful_bernoulli.

    # linear2 (bf16 operands, f32 accumulation on the MXU)
    x2 = jnp.dot(h.astype(jnp.bfloat16), w2_ref[...],
                 preferred_element_type=jnp.float32)
    x2 = x2 + b2_ref[...]

    # residual + LayerNorm (eps=1e-5, biased variance), all f32; rsqrt -> EUP.
    y = x + x2
    mean = jnp.mean(y, axis=-1, keepdims=True)
    yc = y - mean
    var = jnp.mean(yc * yc, axis=-1, keepdims=True)
    out = yc * lax.rsqrt(var + 1e-5) * g_ref[...] + beta_ref[...]
    o_ref[...] = out.astype(o_ref.dtype)


def _rff_kernel_chunked(x_ref, w1_ref, b1_ref, w2_ref, b2_ref, g_ref, beta_ref,
                        o_ref, acc_ref):
    """Hidden dim streamed in chunks (grid axis 1); f32 accumulator for x2."""
    j = pl.program_id(1)

    @pl.when(j == 0)
    def _():
        acc_ref[...] = jnp.zeros_like(acc_ref)

    x_bf = x_ref[...].astype(jnp.bfloat16)
    # h_chunk = relu(x @ W1^T[:, chunk] + b1[chunk])
    h = jnp.dot(x_bf, w1_ref[...], preferred_element_type=jnp.float32)
    h = jnp.maximum(h + b1_ref[...], 0.0)
    # x2 += h_chunk @ W2^T[chunk, :]
    acc_ref[...] += jnp.dot(h.astype(jnp.bfloat16), w2_ref[...],
                            preferred_element_type=jnp.float32)

    @pl.when(j == pl.num_programs(1) - 1)
    def _():
        x = x_ref[...].astype(jnp.float32)
        x2 = acc_ref[...] + b2_ref[...]
        y = x + x2
        mean = jnp.mean(y, axis=-1, keepdims=True)
        yc = y - mean
        var = jnp.mean(yc * yc, axis=-1, keepdims=True)
        out = yc * lax.rsqrt(var + 1e-5) * g_ref[...] + beta_ref[...]
        o_ref[...] = out.astype(o_ref.dtype)


# --------------------------------------------------------------------------- #
# Wrapper
# --------------------------------------------------------------------------- #
def rff_forward(x, w1, b1, w2, b2, gamma, beta, *, row_tile=512,
                hidden_tile=512, force_chunked=False, out_dtype=None):
    """x: (B, T, D). w1, w2: (D, D) in PyTorch (out, in) convention. b*, gamma, beta: (D,)."""
    B, T, D = x.shape
    rows = B * T
    x2d = x.reshape(rows, D)                      # free view, no host-side pad
    out_dtype = x.dtype if out_dtype is None else out_dtype
    in_bytes = jnp.dtype(x.dtype).itemsize
    out_bytes = jnp.dtype(out_dtype).itemsize

    # Generation-aware VMEM budget (v7x: 64 MiB/core, v5e/v6e: 128 MiB).
    try:
        vmem_cap = int(pltpu.get_tpu_info().vmem_capacity_bytes)
    except Exception:
        vmem_cap = 64 * 1024 * 1024               # conservative, fits all gens
    vmem_budget = int(0.85 * vmem_cap)

    # PyTorch Linear computes x @ W^T + b -> pre-transpose to (in, out), bf16.
    w1_t = w1.T.astype(jnp.bfloat16)
    w2_t = w2.T.astype(jnp.bfloat16)
    b1_r = b1.reshape(1, D).astype(jnp.float32)
    b2_r = b2.reshape(1, D).astype(jnp.float32)
    g_r = gamma.reshape(1, D).astype(jnp.float32)
    beta_r = beta.reshape(1, D).astype(jnp.float32)

    weight_bytes = 2 * D * D * 2                  # both bf16 weights, single copy
    resident = (not force_chunked) and (weight_bytes <= int(0.4 * vmem_cap))

    hk = 0
    if not resident:
        hk = max(128, min(_round_up(hidden_tile, 128), _round_up(D, 128)))

    # Row tile: large (amortizes ~0.35us/step + per-step MXU weight pushes) but
    # clamped so the "parallel" row axis keeps >= 2 steps for v7x's 2 TCs.
    rt = min(_round_up(row_tile, 8), max(8, _round_up(_cdiv(rows, 2), 8)))

    def footprint(rt_):
        io = 2 * rt_ * D * in_bytes + 2 * rt_ * D * out_bytes   # double-buffered x/out
        interm = 5 * rt_ * D * 4                                # f32/bf16 temporaries
        params = 8 * D * 4
        if resident:
            w = weight_bytes                                    # single copy
            acc = 0
        else:
            w = 2 * (D * hk + hk * D) * 2                       # double-buffered chunks
            acc = rt_ * D * 4                                   # f32 accumulator scratch
        return io + interm + params + w + acc

    while rt > 64 and int(footprint(rt) * 1.15) > vmem_budget:
        rt = max(64, _round_up(rt // 2, 8))

    grid_rows = _cdiv(rows, rt)   # ragged last block: padded reads, masked writes
    vmem_limit = int(min(max(footprint(rt) * 1.15, 32 * 1024 * 1024), vmem_budget))

    if resident:
        cost = pl.CostEstimate(
            flops=4 * rows * D * D,
            transcendentals=rows,
            bytes_accessed=rows * D * (in_bytes + out_bytes) + weight_bytes + 4 * D * 4)
        out2d = pl.pallas_call(
            _rff_kernel_resident,
            out_shape=jax.ShapeDtypeStruct((rows, D), out_dtype),
            grid_spec=pltpu.PrefetchScalarGridSpec(
                num_scalar_prefetch=0,
                grid=(grid_rows,),
                in_specs=[
                    # Row-tiled activation (pipelined / double-buffered).
                    pl.BlockSpec((rt, D), lambda i: (i, 0)),
                    # Grid-invariant operands: whole-array VMEM residents,
                    # loaded once, never double-buffered.
                    pl.BlockSpec(memory_space=pltpu.MemorySpace.VMEM),  # W1^T (bf16)
                    pl.BlockSpec(memory_space=pltpu.MemorySpace.VMEM),  # b1
                    pl.BlockSpec(memory_space=pltpu.MemorySpace.VMEM),  # W2^T (bf16)
                    pl.BlockSpec(memory_space=pltpu.MemorySpace.VMEM),  # b2
                    pl.BlockSpec(memory_space=pltpu.MemorySpace.VMEM),  # gamma
                    pl.BlockSpec(memory_space=pltpu.MemorySpace.VMEM),  # beta
                ],
                out_specs=pl.BlockSpec((rt, D), lambda i: (i, 0)),
            ),
            compiler_params=pltpu.CompilerParams(
                dimension_semantics=("parallel",),
                vmem_limit_bytes=vmem_limit),
            cost_estimate=cost,
        )(x2d, w1_t, b1_r, w2_t, b2_r, g_r, beta_r)
    else:
        # Zero-pad the hidden dim of the weights to a multiple of hk: padded W1
        # columns + zero b1 give h==0, which contributes nothing through the
        # padded (zero) W2 rows -> numerically exact.
        D_pad = _round_up(D, hk)
        if D_pad != D:
            w1_t = jnp.pad(w1_t, ((0, 0), (0, D_pad - D)))
            b1_r = jnp.pad(b1_r, ((0, 0), (0, D_pad - D)))
            w2_t = jnp.pad(w2_t, ((0, D_pad - D), (0, 0)))
        n_hidden = D_pad // hk
        # TODO(synk): for extreme D where even a (D, hk) chunk is too big, also
        # tile the contraction (K) dim of the first matmul.
        cost = pl.CostEstimate(
            flops=4 * rows * D_pad * D,
            transcendentals=rows,
            bytes_accessed=(rows * D * (in_bytes + out_bytes)
                            + grid_rows * 2 * D_pad * D * 2 + 4 * D * 4))
        out2d = pl.pallas_call(
            _rff_kernel_chunked,
            out_shape=jax.ShapeDtypeStruct((rows, D), out_dtype),
            grid_spec=pltpu.PrefetchScalarGridSpec(
                num_scalar_prefetch=0,
                grid=(grid_rows, n_hidden),
                in_specs=[
                    pl.BlockSpec((rt, D), lambda i, j: (i, 0)),    # x (stays for all j)
                    pl.BlockSpec((D, hk), lambda i, j: (0, j)),    # W1^T column chunk
                    pl.BlockSpec((1, hk), lambda i, j: (0, j)),    # b1 chunk
                    pl.BlockSpec((hk, D), lambda i, j: (j, 0)),    # W2^T row chunk
                    pl.BlockSpec(memory_space=pltpu.MemorySpace.VMEM),  # b2
                    pl.BlockSpec(memory_space=pltpu.MemorySpace.VMEM),  # gamma
                    pl.BlockSpec(memory_space=pltpu.MemorySpace.VMEM),  # beta
                ],
                out_specs=pl.BlockSpec((rt, D), lambda i, j: (i, 0)),
                scratch_shapes=[pltpu.VMEM((rt, D), jnp.float32)],
            ),
            compiler_params=pltpu.CompilerParams(
                dimension_semantics=("parallel", "arbitrary"),
                vmem_limit_bytes=vmem_limit),
            cost_estimate=cost,
        )(x2d, w1_t, b1_r, w2_t, b2_r, g_r, beta_r)

    return out2d.reshape(B, T, D)


# --------------------------------------------------------------------------- #
# Demo / correctness check
# --------------------------------------------------------------------------- #
if __name__ == "__main__":
    # D=256 keeps the feature dim a full 256-wide MXU pass on v6e/v7x and
    # lane-dense stores; rows=500 exercises the ragged (masked) last row block.
    B, T, dim = 2, 250, 256
    key = jax.random.PRNGKey(0)
    kx, kw1, kb1, kw2, kb2 = jax.random.split(key, 5)

    x = jax.random.normal(kx, (B, T, dim), dtype=jnp.float32)

    bound = 1.0 / jnp.sqrt(dim)
    w1 = jax.random.uniform(kw1, (dim, dim), minval=-bound, maxval=bound, dtype=jnp.float32)
    b1 = jax.random.uniform(kb1, (dim,), minval=-bound, maxval=bound, dtype=jnp.float32)
    w2 = jax.random.uniform(kw2, (dim, dim), minval=-bound, maxval=bound, dtype=jnp.float32)
    b2 = jax.random.uniform(kb2, (dim,), minval=-bound, maxval=bound, dtype=jnp.float32)
    gamma = jnp.ones((dim,), jnp.float32)
    beta = jnp.zeros((dim,), jnp.float32)

    # Path A: weight-resident (default).  Path B: hidden-dim chunked (forced
    # here with a small chunk so the accumulator/finalize logic is exercised).
    out_resident = rff_forward(x, w1, b1, w2, b2, gamma, beta)
    out_chunked = rff_forward(x, w1, b1, w2, b2, gamma, beta,
                              force_chunked=True, hidden_tile=128)
    jax.block_until_ready((out_resident, out_chunked))

    # Pure-JAX reference with matching MXU dtypes (bf16 operands, f32 accum).
    x2d = x.reshape(-1, dim)
    h = jnp.dot(x2d.astype(jnp.bfloat16), w1.T.astype(jnp.bfloat16),
                preferred_element_type=jnp.float32) + b1
    h = jnp.maximum(h, 0.0)
    x2 = jnp.dot(h.astype(jnp.bfloat16), w2.T.astype(jnp.bfloat16),
                 preferred_element_type=jnp.float32) + b2
    y = x2d + x2
    mean = jnp.mean(y, axis=-1, keepdims=True)
    yc = y - mean
    var = jnp.mean(yc * yc, axis=-1, keepdims=True)
    ref = (yc / jnp.sqrt(var + 1e-5) * gamma + beta).reshape(B, T, dim)

    assert jnp.allclose(out_resident, ref, atol=5e-3, rtol=5e-3), "resident path mismatch"
    assert jnp.allclose(out_chunked, ref, atol=7e-3, rtol=7e-3), "chunked path mismatch"
    print("KERNEL_OK")
</pallas_src>

<mosaic_0001>
module attributes {stable_mosaic.version = 11 : i64} {
  func.func @_rff_kernel_resident(%arg0: i32, %arg1: memref<256x256xf32, #tpu.memory_space<vmem>>, %arg2: memref<256x256xbf16, #tpu.memory_space<vmem>>, %arg3: memref<1x256xf32, #tpu.memory_space<vmem>>, %arg4: memref<256x256xbf16, #tpu.memory_space<vmem>>, %arg5: memref<1x256xf32, #tpu.memory_space<vmem>>, %arg6: memref<1x256xf32, #tpu.memory_space<vmem>>, %arg7: memref<1x256xf32, #tpu.memory_space<vmem>>, %arg8: memref<256x256xf32, #tpu.memory_space<vmem>>) attributes {dimension_semantics = [#tpu.dimension_semantics<parallel>], iteration_bounds = array<i64: 2>, scalar_prefetch = 0 : i64, scratch_operands = 0 : i64, tpu.core_type = #tpu.core_type<tc>, window_params = [{transform_indices = @transform_0, window_bounds = array<i64: 256, 256>}, {pipeline_mode = #tpu.pipeline_mode<synchronous>, transform_indices = @transform_1, window_bounds = array<i64: 256, 256>}, {pipeline_mode = #tpu.pipeline_mode<synchronous>, transform_indices = @transform_2, window_bounds = array<i64: 1, 256>}, {pipeline_mode = #tpu.pipeline_mode<synchronous>, transform_indices = @transform_3, window_bounds = array<i64: 256, 256>}, {pipeline_mode = #tpu.pipeline_mode<synchronous>, transform_indices = @transform_4, window_bounds = array<i64: 1, 256>}, {pipeline_mode = #tpu.pipeline_mode<synchronous>, transform_indices = @transform_5, window_bounds = array<i64: 1, 256>}, {pipeline_mode = #tpu.pipeline_mode<synchronous>, transform_indices = @transform_6, window_bounds = array<i64: 1, 256>}, {transform_indices = @transform_7, window_bounds = array<i64: 256, 256>}]} {
    %c0 = arith.constant 0 : index
    %c0_0 = arith.constant 0 : index
    %0 = vector.load %arg1[%c0, %c0_0] : memref<256x256xf32, #tpu.memory_space<vmem>>, vector<256x256xf32>
    %1 = arith.truncf %0 : vector<256x256xf32> to vector<256x256xbf16>
    %c0_1 = arith.constant 0 : index
    %c0_2 = arith.constant 0 : index
    %2 = vector.load %arg2[%c0_1, %c0_2] : memref<256x256xbf16, #tpu.memory_space<vmem>>, vector<256x256xbf16>
    %cst = arith.constant dense<0.000000e+00> : vector<256x256xf32>
    %3 = tpu.matmul %1, %2, %cst {dimension_numbers = #tpu.dot_dimension_numbers<[1], [0], [0], [1], [0, 0, 1, 1], [], []>} : vector<256x256xbf16>, vector<256x256xbf16>, vector<256x256xf32> -> vector<256x256xf32>
    %c0_3 = arith.constant 0 : index
    %c0_4 = arith.constant 0 : index
    %4 = vector.load %arg3[%c0_3, %c0_4] : memref<1x256xf32, #tpu.memory_space<vmem>>, vector<1x256xf32>
    %5 = vector.broadcast %4 : vector<1x256xf32> to vector<256x256xf32>
    %6 = arith.addf %3, %5 : vector<256x256xf32>
    %cst_5 = arith.constant 0.000000e+00 : f32
    %7 = vector.broadcast %cst_5 : f32 to vector<256x256xf32>
    %8 = arith.maximumf %6, %7 : vector<256x256xf32>
    %9 = arith.truncf %8 : vector<256x256xf32> to vector<256x256xbf16>
    %c0_6 = arith.constant 0 : index
    %c0_7 = arith.constant 0 : index
    %10 = vector.load %arg4[%c0_6, %c0_7] : memref<256x256xbf16, #tpu.memory_space<vmem>>, vector<256x256xbf16>
    %cst_8 = arith.constant dense<0.000000e+00> : vector<256x256xf32>
    %11 = tpu.matmul %9, %10, %cst_8 {dimension_numbers = #tpu.dot_dimension_numbers<[1], [0], [0], [1], [0, 0, 1, 1], [], []>} : vector<256x256xbf16>, vector<256x256xbf16>, vector<256x256xf32> -> vector<256x256xf32>
    %c0_9 = arith.constant 0 : index
    %c0_10 = arith.constant 0 : index
    %12 = vector.load %arg5[%c0_9, %c0_10] : memref<1x256xf32, #tpu.memory_space<vmem>>, vector<1x256xf32>
    %13 = vector.broadcast %12 : vector<1x256xf32> to vector<256x256xf32>
    %14 = arith.addf %11, %13 : vector<256x256xf32>
    %15 = arith.addf %0, %14 : vector<256x256xf32>
    %cst_11 = arith.constant dense<0.000000e+00> : vector<256xf32>
    %16 = vector.multi_reduction <add>, %15, %cst_11 [1] : vector<256x256xf32> to vector<256xf32>
    %17 = vector.shape_cast %16 : vector<256xf32> to vector<256x1xf32>
    %cst_12 = arith.constant 2.560000e+02 : f32
    %18 = vector.broadcast %cst_12 : f32 to vector<256x1xf32>
    %19 = arith.divf %17, %18 : vector<256x1xf32>
    %20 = vector.broadcast %19 : vector<256x1xf32> to vector<256x256xf32>
    %21 = arith.subf %15, %20 : vector<256x256xf32>
    %22 = arith.mulf %21, %21 : vector<256x256xf32>
    %cst_13 = arith.constant dense<0.000000e+00> : vector<256xf32>
    %23 = vector.multi_reduction <add>, %22, %cst_13 [1] : vector<256x256xf32> to vector<256xf32>
    %24 = vector.shape_cast %23 : vector<256xf32> to vector<256x1xf32>
    %cst_14 = arith.constant 2.560000e+02 : f32
    %25 = vector.broadcast %cst_14 : f32 to vector<256x1xf32>
    %26 = arith.divf %24, %25 : vector<256x1xf32>
    %cst_15 = arith.constant 9.99999974E-6 : f32
    %27 = vector.broadcast %cst_15 : f32 to vector<256x1xf32>
    %28 = arith.addf %26, %27 : vector<256x1xf32>
    %29 = math.rsqrt %28 : vector<256x1xf32>
    %30 = vector.broadcast %29 : vector<256x1xf32> to vector<256x256xf32>
    %31 = arith.mulf %21, %30 : vector<256x256xf32>
    %c0_16 = arith.constant 0 : index
    %c0_17 = arith.constant 0 : index
    %32 = vector.load %arg6[%c0_16, %c0_17] : memref<1x256xf32, #tpu.memory_space<vmem>>, vector<1x256xf32>
    %33 = vector.broadcast %32 : vector<1x256xf32> to vector<256x256xf32>
    %34 = arith.mulf %31, %33 : vector<256x256xf32>
    %c0_18 = arith.constant 0 : index
    %c0_19 = arith.constant 0 : index
    %35 = vector.load %arg7[%c0_18, %c0_19] : memref<1x256xf32, #tpu.memory_space<vmem>>, vector<1x256xf32>
    %36 = vector.broadcast %35 : vector<1x256xf32> to vector<256x256xf32>
    %37 = arith.addf %34, %36 : vector<256x256xf32>
    %c0_20 = arith.constant 0 : index
    %c0_21 = arith.constant 0 : index
    %38 = vector.load %arg8[%c0_20, %c0_21] : memref<256x256xf32, #tpu.memory_space<vmem>>, vector<256x256xf32>
    tpu.vector_store %arg8[%c0_20, %c0_21], %37 {strides = array<i32>} : memref<256x256xf32, #tpu.memory_space<vmem>>, vector<256x256xf32>,
    return
  }
  func.func @transform_0(%arg0: i32) -> (i32, i32) {
    %c0_i32 = arith.constant 0 : i32
    %c0_i32_0 = arith.constant 0 : i32
    return %arg0, %c0_i32 : i32, i32
  }
  func.func @transform_1(%arg0: i32) -> (i32, i32) {
    %c0_i32 = arith.constant 0 : i32
    %c0_i32_0 = arith.constant 0 : i32
    %c0_i32_1 = arith.constant 0 : i32
    return %c0_i32, %c0_i32_0 : i32, i32
  }
  func.func @transform_2(%arg0: i32) -> (i32, i32) {
    %c0_i32 = arith.constant 0 : i32
    %c0_i32_0 = arith.constant 0 : i32
    %c0_i32_1 = arith.constant 0 : i32
    return %c0_i32, %c0_i32_0 : i32, i32
  }
  func.func @transform_3(%arg0: i32) -> (i32, i32) {
    %c0_i32 = arith.constant 0 : i32
    %c0_i32_0 = arith.constant 0 : i32
    %c0_i32_1 = arith.constant 0 : i32
    return %c0_i32, %c0_i32_0 : i32, i32
  }
  func.func @transform_4(%arg0: i32) -> (i32, i32) {
    %c0_i32 = arith.constant 0 : i32
    %c0_i32_0 = arith.constant 0 : i32
    %c0_i32_1 = arith.constant 0 : i32
    return %c0_i32, %c0_i32_0 : i32, i32
  }
  func.func @transform_5(%arg0: i32) -> (i32, i32) {
    %c0_i32 = arith.constant 0 : i32
    %c0_i32_0 = arith.constant 0 : i32
    %c0_i32_1 = arith.constant 0 : i32
    return %c0_i32, %c0_i32_0 : i32, i32
  }
  func.func @transform_6(%arg0: i32) -> (i32, i32) {
    %c0_i32 = arith.constant 0 : i32
    %c0_i32_0 = arith.constant 0 : i32
    %c0_i32_1 = arith.constant 0 : i32
    return %c0_i32, %c0_i32_0 : i32, i32
  }
  func.func @transform_7(%arg0: i32) -> (i32, i32) {
    %c0_i32 = arith.constant 0 : i32
    %c0_i32_0 = arith.constant 0 : i32
    return %arg0, %c0_i32 : i32, i32
  }
}

</mosaic_0001>

<llo_original>
// kernel: tpu_custom_call.1
$region0: #{tpu_custom_call.1}
  #allocation0 [shape = 'u32[]', space=smem, size = 0x4, offset = 0x4, fixed_abs, tag = 'smem constant byte address 0x4 - core index']
  #allocation1 [shape = 'u32[144,128]{1,0:T(1,128)}', space=vmem, size = 0x12000, scoped, tag = 'internal scratch']
  %s0 = inlined_call_operand.hbm [shape: f32[500,256], index: 0, kind: input, shape index: {}]
  %s1 = inlined_call_operand.hbm [shape: bf16[256,256], index: 1, kind: input, shape index: {}]
  %s2 = inlined_call_operand.vmem [shape: f32[1,256], index: 2, kind: input, shape index: {}]
  %s3 = inlined_call_operand.hbm [shape: bf16[256,256], index: 3, kind: input, shape index: {}]
  %s4 = inlined_call_operand.vmem [shape: f32[1,256], index: 4, kind: input, shape index: {}]
  %s5 = inlined_call_operand.vmem [shape: f32[1,256], index: 5, kind: input, shape index: {}]
  %s6 = inlined_call_operand.vmem [shape: f32[1,256], index: 6, kind: input, shape index: {}]
  %s7 = inlined_call_operand.hbm [shape: f32[500,256], index: 7, kind: output, shape index: {}]
  %s8 = sld [smem:[#allocation0]]
  $region73: #{tpu_custom_call.1} parent=0
    _
  %s10 = ssub.s32 1, %s8
  %s11 = scalar_select 0, %s10, %s8
  $region1: #{tpu_custom_call.1} parent=0
    #allocation2 [shape = 'u8[524288]{0}', space=vmem, size = 0x80000, scoped, tag = 'input window, operand 0']
    #allocation3 [shape = 's32[2]{0}', space=sflag, size = 0x8, scoped, tag = 'scoped memory for tpu_custom_call.1']
    #allocation4 [shape = 's32[2]{0}', space=sflag, size = 0x8, scoped, tag = 'scoped memory for tpu_custom_call.1']
    #allocation5 [shape = 'u8[131072]{0}', space=vmem, size = 0x20000, scoped, tag = 'input window, operand 1, single buffered']
    #allocation6 [shape = 's32[1]{0}', space=sflag, size = 0x4, scoped, tag = 'scoped memory for tpu_custom_call.1']
    #allocation7 [shape = 'u8[131072]{0}', space=vmem, size = 0x20000, scoped, tag = 'input window, operand 3, single buffered']
    #allocation8 [shape = 'u8[524288]{0}', space=vmem, size = 0x80000, scoped, tag = 'output window, operand 0']
    %12 = vsyncpa [#allocation3], 0
    %s13 = scalar_lea.sflag [#allocation3], 1
    %14 = vsyncpa %s13, 0
    %15 = vsyncpa [#allocation6], 0
    %16 = vsyncpa [#allocation4], 0
    %s17 = scalar_lea.sflag [#allocation4], 1
    %18 = vsyncpa %s17, 0
    loop: start=0, step=1, limit=4
    $region2: #{tpu_custom_call.1} parent=1 // loop_pre_header
      _
    $region3: #{tpu_custom_call.1} parent=1 // loop_header
      %s20 = sphi 0, %s24
      %p21 = scmp.ge.s32.totalorder %s20, 4
      %s30 = sphi 0, %s32
      %s33 = sphi 0, %s30
      %s34 = sphi 0, %s33
      %s50 = sphi 0, %s34
      %s54 = sphi 0, %s54
      %s56 = sphi 0, %s54
      %s57 = sphi 0, %s56
      %s71 = sphi 0, %s57
      %s75 = sphi 0, %s75
      %s77 = sphi 0, %s75
      %s78 = sphi 0, %s77
      %s92 = sphi 0, %s78
      %s96 = sphi 0, %s96
      %s98 = sphi 0, %s96
      %s99 = sphi 0, %s98
      %s113 = sphi 0, %s99
      %s117 = sphi 0, %s117
      %s119 = sphi 0, %s117
      %s120 = sphi 0, %s119
      %s134 = sphi 0, %s120
      %s138 = sphi 0, %s138
      %s140 = sphi 0, %s138
      %s141 = sphi 0, %s140
      %s155 = sphi 0, %s141
      %s159 = sphi 0, %s159
      %s161 = sphi 0, %s159
      %s162 = sphi 0, %s161
      %s176 = sphi 0, %s162
      %s182 = sphi 0, %s184
      %s185 = sphi 0, %s182
      %s186 = sphi 0, %s185
      %s202 = sphi 0, %s186
    $region4: #{tpu_custom_call.1} parent=1 // loop_header_branch
      %23 = sbr.rel (%p21) target = $region8
    $region5: #{tpu_custom_call.1} parent=1 // loop_body
      %s25 = ssub.s32 %s20, 1
      %s26 = ssub.s32 %s20, 2
      %s27 = sadd.s32 %s20, 1
      %s28 = ssub.s32 %s20, %s27
      %p29 = scmp.eq.s32.totalorder %s28, 0
      %s31 = sadd.s32 %s30, 1
      %s32 = scalar_select %p29, %s30, %s31
      %p35 = pneg %p29
      %p36 = scmp.eq.s32.totalorder %s20, 1
      %p37 = por %p35, %p36
      %p38 = scmp.ne.s32.totalorder %s30, %s33
      %p39 = scmp.eq.s32.totalorder %s20, 0
      %p40 = por %p38, %p39
      %p41 = scmp.ne.s32.totalorder %s30, %s33
      %p42 = scmp.eq.s32.totalorder %s25, 1
      %p43 = por %p41, %p42
      %p44 = scmp.ne.s32.totalorder %s33, %s34
      %p45 = scmp.eq.s32.totalorder %s25, 0
      %p46 = por %p44, %p45
      %p47 = scmp.ne.s32.totalorder %s33, %s34
      %p48 = scmp.eq.s32.totalorder %s26, 1
      %p49 = por %p47, %p48
      %p51 = scmp.ne.s32.totalorder %s34, %s50
      %p52 = scmp.eq.s32.totalorder %s26, 0
      %p53 = por %p51, %p52
      %s55 = sadd.s32 %s54, 1
      %p58 = scmp.eq.s32.totalorder %s20, 1
      %p59 = scmp.ne.s32.totalorder %s54, %s56
      %p60 = scmp.eq.s32.totalorder %s20, 0
      %p61 = por %p59, %p60
      %p62 = scmp.ne.s32.totalorder %s54, %s56
      %p63 = scmp.eq.s32.totalorder %s25, 1
      %p64 = por %p62, %p63
      %p65 = scmp.ne.s32.totalorder %s56, %s57
      %p66 = scmp.eq.s32.totalorder %s25, 0
      %p67 = por %p65, %p66
      %p68 = scmp.ne.s32.totalorder %s56, %s57
      %p69 = scmp.eq.s32.totalorder %s26, 1
      %p70 = por %p68, %p69
      %p72 = scmp.ne.s32.totalorder %s57, %s71
      %p73 = scmp.eq.s32.totalorder %s26, 0
      %p74 = por %p72, %p73
      %s76 = sadd.s32 %s75, 1
      %p79 = scmp.eq.s32.totalorder %s20, 1
      %p80 = scmp.ne.s32.totalorder %s75, %s77
      %p81 = scmp.eq.s32.totalorder %s20, 0
      %p82 = por %p80, %p81
      %p83 = scmp.ne.s32.totalorder %s75, %s77
      %p84 = scmp.eq.s32.totalorder %s25, 1
      %p85 = por %p83, %p84
      %p86 = scmp.ne.s32.totalorder %s77, %s78
      %p87 = scmp.eq.s32.totalorder %s25, 0
      %p88 = por %p86, %p87
      %p89 = scmp.ne.s32.totalorder %s77, %s78
      %p90 = scmp.eq.s32.totalorder %s26, 1
      %p91 = por %p89, %p90
      %p93 = scmp.ne.s32.totalorder %s78, %s92
      %p94 = scmp.eq.s32.totalorder %s26, 0
      %p95 = por %p93, %p94
      %s97 = sadd.s32 %s96, 1
      %p100 = scmp.eq.s32.totalorder %s20, 1
      %p101 = scmp.ne.s32.totalorder %s96, %s98
      %p102 = scmp.eq.s32.totalorder %s20, 0
      %p103 = por %p101, %p102
      %p104 = scmp.ne.s32.totalorder %s96, %s98
      %p105 = scmp.eq.s32.totalorder %s25, 1
      %p106 = por %p104, %p105
      %p107 = scmp.ne.s32.totalorder %s98, %s99
      %p108 = scmp.eq.s32.totalorder %s25, 0
      %p109 = por %p107, %p108
      %p110 = scmp.ne.s32.totalorder %s98, %s99
      %p111 = scmp.eq.s32.totalorder %s26, 1
      %p112 = por %p110, %p111
      %p114 = scmp.ne.s32.totalorder %s99, %s113
      %p115 = scmp.eq.s32.totalorder %s26, 0
      %p116 = por %p114, %p115
      %s118 = sadd.s32 %s117, 1
      %p121 = scmp.eq.s32.totalorder %s20, 1
      %p122 = scmp.ne.s32.totalorder %s117, %s119
      %p123 = scmp.eq.s32.totalorder %s20, 0
      %p124 = por %p122, %p123
      %p125 = scmp.ne.s32.totalorder %s117, %s119
      %p126 = scmp.eq.s32.totalorder %s25, 1
      %p127 = por %p125, %p126
      %p128 = scmp.ne.s32.totalorder %s119, %s120
      %p129 = scmp.eq.s32.totalorder %s25, 0
      %p130 = por %p128, %p129
      %p131 = scmp.ne.s32.totalorder %s119, %s120
      %p132 = scmp.eq.s32.totalorder %s26, 1
      %p133 = por %p131, %p132
      %p135 = scmp.ne.s32.totalorder %s120, %s134
      %p136 = scmp.eq.s32.totalorder %s26, 0
      %p137 = por %p135, %p136
      %s139 = sadd.s32 %s138, 1
      %p142 = scmp.eq.s32.totalorder %s20, 1
      %p143 = scmp.ne.s32.totalorder %s138, %s140
      %p144 = scmp.eq.s32.totalorder %s20, 0
      %p145 = por %p143, %p144
      %p146 = scmp.ne.s32.totalorder %s138, %s140
      %p147 = scmp.eq.s32.totalorder %s25, 1
      %p148 = por %p146, %p147
      %p149 = scmp.ne.s32.totalorder %s140, %s141
      %p150 = scmp.eq.s32.totalorder %s25, 0
      %p151 = por %p149, %p150
      %p152 = scmp.ne.s32.totalorder %s140, %s141
      %p153 = scmp.eq.s32.totalorder %s26, 1
      %p154 = por %p152, %p153
      %p156 = scmp.ne.s32.totalorder %s141, %s155
      %p157 = scmp.eq.s32.totalorder %s26, 0
      %p158 = por %p156, %p157
      %s160 = sadd.s32 %s159, 1
      %p163 = scmp.eq.s32.totalorder %s20, 1
      %p164 = scmp.ne.s32.totalorder %s159, %s161
      %p165 = scmp.eq.s32.totalorder %s20, 0
      %p166 = por %p164, %p165
      %p167 = scmp.ne.s32.totalorder %s159, %s161
      %p168 = scmp.eq.s32.totalorder %s25, 1
      %p169 = por %p167, %p168
      %p170 = scmp.ne.s32.totalorder %s161, %s162
      %p171 = scmp.eq.s32.totalorder %s25, 0
      %p172 = por %p170, %p171
      %p173 = scmp.ne.s32.totalorder %s161, %s162
      %p174 = scmp.eq.s32.totalorder %s26, 1
      %p175 = por %p173, %p174
      %p177 = scmp.ne.s32.totalorder %s162, %s176
      %p178 = scmp.eq.s32.totalorder %s26, 0
      %p179 = por %p177, %p178
      %s180 = ssub.s32 %s20, %s27
      %p181 = scmp.eq.s32.totalorder %s180, 0
      %s183 = sadd.s32 %s182, 1
      %s184 = scalar_select %p181, %s182, %s183
      %p187 = pneg %p181
      %p188 = scmp.eq.s32.totalorder %s20, 1
      %p189 = por %p187, %p188
      %p190 = scmp.ne.s32.totalorder %s182, %s185
      %p191 = scmp.eq.s32.totalorder %s20, 0
      %p192 = por %p190, %p191
      %p193 = scmp.ne.s32.totalorder %s182, %s185
      %p194 = scmp.eq.s32.totalorder %s25, 1
      %p195 = por %p193, %p194
      %p196 = scmp.ne.s32.totalorder %s185, %s186
      %p197 = scmp.eq.s32.totalorder %s25, 0
      %p198 = por %p196, %p197
      %p199 = scmp.ne.s32.totalorder %s185, %s186
      %p200 = scmp.eq.s32.totalorder %s26, 1
      %p201 = por %p199, %p200
      %p203 = scmp.ne.s32.totalorder %s186, %s202
      %p204 = scmp.eq.s32.totalorder %s26, 0
      %p205 = por %p203, %p204
      %p206 = scmp.le.s32.totalorder 1, %s20
      %p207 = scmp.lt.s32.totalorder %s20, 3
      %p208 = pnand %p206, %p207
      %p209 = pneg %p208
      // Predicated region
      $region9: #{tpu_custom_call.1} parent=5 // pred_check
        _
      $region10: #{tpu_custom_call.1} parent=5 // pred_check_branch
        %211 = sbr.rel (%p208) target = $region12
      $region11: #{tpu_custom_call.1} parent=5 // pred_region
        %s212 = ssub.s32 %s20, 1
        // Predicated region
        $region13: #{tpu_custom_call.1} parent=11 // pred_check
          %p213 = pneg %p67
        $region14: #{tpu_custom_call.1} parent=11 // pred_check_branch
          %215 = sbr.rel (%p213) target = $region16
        $region15: #{tpu_custom_call.1} parent=11 // pred_region
          %s217 = ssub.s32 4096, 4096
          %218 = vsyncadd [#allocation6], %s217
          %s219 = sshll.u32 [#allocation5], 4
          %s220 = int_to_ptr.vmem [resolvable:$true] %s219
          %225 = dma.hbm_to_vmem [thread:$0]  %s1, 4096, %s220, [#allocation6], 128, 128, 8
        $region16: #{tpu_custom_call.1} parent=11 // pred_fallthru
          _
        // Predicated region
        $region17: #{tpu_custom_call.1} parent=11 // pred_check
          %p226 = pneg %p88
        $region18: #{tpu_custom_call.1} parent=11 // pred_check_branch
          %228 = sbr.rel (%p226) target = $region20
        $region19: #{tpu_custom_call.1} parent=11 // pred_region
          _
        $region20: #{tpu_custom_call.1} parent=11 // pred_fallthru
          _
        // Predicated region
        $region21: #{tpu_custom_call.1} parent=11 // pred_check
          %p229 = pneg %p109
        $region22: #{tpu_custom_call.1} parent=11 // pred_check_branch
          %231 = sbr.rel (%p229) target = $region24
        $region23: #{tpu_custom_call.1} parent=11 // pred_region
          %s233 = ssub.s32 4096, 4096
          %234 = vsyncadd [#allocation6], %s233
          %s235 = sshll.u32 [#allocation7], 4
          %s236 = int_to_ptr.vmem [resolvable:$true] %s235
          %241 = dma.hbm_to_vmem [thread:$0]  %s3, 4096, %s236, [#allocation6], 128, 128, 8
        $region24: #{tpu_custom_call.1} parent=11 // pred_fallthru
          _
        // Predicated region
        $region25: #{tpu_custom_call.1} parent=11 // pred_check
          %p242 = pneg %p130
        $region26: #{tpu_custom_call.1} parent=11 // pred_check_branch
          %244 = sbr.rel (%p242) target = $region28
        $region27: #{tpu_custom_call.1} parent=11 // pred_region
          _
        $region28: #{tpu_custom_call.1} parent=11 // pred_fallthru
          _
        // Predicated region
        $region29: #{tpu_custom_call.1} parent=11 // pred_check
          %p245 = pneg %p151
        $region30: #{tpu_custom_call.1} parent=11 // pred_check_branch
          %247 = sbr.rel (%p245) target = $region32
        $region31: #{tpu_custom_call.1} parent=11 // pred_region
          _
        $region32: #{tpu_custom_call.1} parent=11 // pred_fallthru
          _
        // Predicated region
        $region33: #{tpu_custom_call.1} parent=11 // pred_check
          %p248 = pneg %p172
        $region34: #{tpu_custom_call.1} parent=11 // pred_check_branch
          %250 = sbr.rel (%p248) target = $region36
        $region35: #{tpu_custom_call.1} parent=11 // pred_region
          _
        $region36: #{tpu_custom_call.1} parent=11 // pred_fallthru
          _
      $region12: #{tpu_custom_call.1} parent=5 // pred_fallthru
        _
      %p251 = scmp.lt.s32.totalorder %s20, 2
      // Predicated region
      $region37: #{tpu_custom_call.1} parent=5 // pred_check
        %p252 = pneg %p251
      $region38: #{tpu_custom_call.1} parent=5 // pred_check_branch
        %254 = sbr.rel (%p252) target = $region40
      $region39: #{tpu_custom_call.1} parent=5 // pred_region
        // Predicated region
        $region41: #{tpu_custom_call.1} parent=39 // pred_check
          %p255 = pneg %p40
        $region42: #{tpu_custom_call.1} parent=39 // pred_check_branch
          %257 = sbr.rel (%p255) target = $region44
        $region43: #{tpu_custom_call.1} parent=39 // pred_region
          %s258 = sand.u32 %s30, 1
          %s259 = scalar_lea.sflag [#allocation3], %s258
          %s260 = sand.u32 %s30, 1
          %s261 = smul.addr %s260, 512
          %s262 = scalar_lea.vmem [#allocation2], %s261
          %s263 = smul.u32 32, %s20
          %s264 = ssub.s32 63, %s263
          %p265 = scmp.lt.s32.totalorder %s264, 32
          %s266 = scalar_select %p265, %s264, 32
          %s267 = smul.u32 128, %s266
          %s268 = smul.u32 %s267, 2
          %s270 = ssub.s32 8192, %s268
          %271 = vsyncadd %s259, %s270
          %p272 = scmp.ne.s32.totalorder 0, %s268
          %s273 = smul.addr %s263, 2
          %s274 = smul.addr %s273, 128
          %s275 = scalar_lea.hbm %s0, %s274
          %s276 = smul.u32 16, %s266
          %s277 = sshll.u32 %s262, 4
          %s278 = int_to_ptr.vmem [resolvable:$true] %s277
          %s279 = sshll.u32 %s276, 4
          %283 = dma.hbm_to_vmem [thread:$0]  (%p272), %s275, %s279, %s278, %s259, 256, 256, 16
        $region44: #{tpu_custom_call.1} parent=39 // pred_fallthru
          _
      $region40: #{tpu_custom_call.1} parent=5 // pred_fallthru
        _
      %p284 = scmp.le.s32.totalorder 1, %s20
      %p285 = scmp.lt.s32.totalorder %s20, 3
      %p286 = pnand %p284, %p285
      %p287 = pneg %p286
      // Predicated region
      $region45: #{tpu_custom_call.1} parent=5 // pred_check
        _
      $region46: #{tpu_custom_call.1} parent=5 // pred_check_branch
        %289 = sbr.rel (%p286) target = $region48
      $region47: #{tpu_custom_call.1} parent=5 // pred_region
        %s290 = ssub.s32 %s20, 1
        %s291 = sand.u32 %s33, 1
        %s292 = scalar_lea.sflag [#allocation3], %s291
        %s293 = sand.u32 %s33, 1
        %s294 = smul.addr %s293, 512
        %s295 = scalar_lea.vmem [#allocation2], %s294
        // Predicated region
        $region49: #{tpu_custom_call.1} parent=47 // pred_check
          %p296 = pneg %p46
        $region50: #{tpu_custom_call.1} parent=47 // pred_check_branch
          %298 = sbr.rel (%p296) target = $region52
        $region51: #{tpu_custom_call.1} parent=47 // pred_region
          %299 = dma.done %s292, 8192
        $region52: #{tpu_custom_call.1} parent=47 // pred_fallthru
          _
        // Predicated region
        $region53: #{tpu_custom_call.1} parent=47 // pred_check
          %p300 = pneg %p67
        $region54: #{tpu_custom_call.1} parent=47 // pred_check_branch
          %302 = sbr.rel (%p300) target = $region56
        $region55: #{tpu_custom_call.1} parent=47 // pred_region
          %303 = dma.done [#allocation6], 4096
        $region56: #{tpu_custom_call.1} parent=47 // pred_fallthru
          _
        // Predicated region
        $region57: #{tpu_custom_call.1} parent=47 // pred_check
          %p304 = pneg %p109
        $region58: #{tpu_custom_call.1} parent=47 // pred_check_branch
          %306 = sbr.rel (%p304) target = $region60
        $region59: #{tpu_custom_call.1} parent=47 // pred_region
          %307 = dma.done [#allocation6], 4096
        $region60: #{tpu_custom_call.1} parent=47 // pred_fallthru
          _
        %s308 = sand.u32 %s33, 1
        %s309 = scalar_lea.sflag [#allocation3], %s308
        %s310 = sand.u32 %s33, 1
        %s311 = smul.addr %s310, 512
        %s312 = scalar_lea.vmem [#allocation2], %s311
        %p313 = pneg %p46
        %p314 = pneg %p43
        %p315 = pneg %p67
        %p316 = pneg %p64
        %p317 = pneg %p88
        %p318 = pneg %p85
        %p319 = pneg %p109
        %p320 = pneg %p106
        %p321 = pneg %p130
        %p322 = pneg %p127
        %p323 = pneg %p151
        %p324 = pneg %p148
        %p325 = pneg %p172
        %p326 = pneg %p169
        %p327 = pneg %p198
        %p328 = pneg %p195
        %s329 = sand.u32 %s185, 1
        %s330 = scalar_lea.sflag [#allocation4], %s329
        %s331 = sand.u32 %s185, 1
        %s332 = smul.addr %s331, 512
        %s333 = scalar_lea.vmem [#allocation8], %s332
        %s334 = smul.u32 32, %s25
        %s335 = ssub.s32 63, %s334
        %p336 = scmp.lt.s32.totalorder %s335, 32
        %s337 = scalar_select %p336, %s335, 32
        %s338 = smul.u32 128, %s337
        %s339 = smul.u32 %s338, 2
        %s340 = smul.u32 32, %s25
        %s341 = ssub.s32 63, %s340
        %p342 = scmp.lt.s32.totalorder %s341, 32
        %s343 = scalar_select %p342, %s341, 32
        %s344 = smul.u32 128, %s343
        %s345 = smul.u32 %s344, 2
        %v346 = vld [vmem:[%s295] sm:$0xff]
        %v347 = vld [vmem:[%s295 + $0x8] sm:$0xff]
        %v348 = vld [vmem:[%s295 + $0x10] sm:$0xff]
        %v349 = vld [vmem:[%s295 + $0x18] sm:$0xff]
        %v350 = vld [vmem:[%s295 + $0x20] sm:$0xff]
        %v351 = vld [vmem:[%s295 + $0x28] sm:$0xff]
        %v352 = vld [vmem:[%s295 + $0x30] sm:$0xff]
        %v353 = vld [vmem:[%s295 + $0x38] sm:$0xff]
        %v354 = vld [vmem:[%s295 + $0x40] sm:$0xff]
        %v355 = vld [vmem:[%s295 + $0x48] sm:$0xff]
        %v356 = vld [vmem:[%s295 + $0x50] sm:$0xff]
        %v357 = vld [vmem:[%s295 + $0x58] sm:$0xff]
        %v358 = vld [vmem:[%s295 + $0x60] sm:$0xff]
        %v359 = vld [vmem:[%s295 + $0x68] sm:$0xff]
        %v360 = vld [vmem:[%s295 + $0x70] sm:$0xff]
        %v361 = vld [vmem:[%s295 + $0x78] sm:$0xff]
        %v362 = vld [vmem:[%s295 + $0x80] sm:$0xff]
        %v363 = vld [vmem:[%s295 + $0x88] sm:$0xff]
        %v364 = vld [vmem:[%s295 + $0x90] sm:$0xff]
        %v365 = vld [vmem:[%s295 + $0x98] sm:$0xff]
        %v366 = vld [vmem:[%s295 + $0xa0] sm:$0xff]
        %v367 = vld [vmem:[%s295 + $0xa8] sm:$0xff]
        %v368 = vld [vmem:[%s295 + $0xb0] sm:$0xff]
        %v369 = vld [vmem:[%s295 + $0xb8] sm:$0xff]
        %v370 = vld [vmem:[%s295 + $0xc0] sm:$0xff]
        %v371 = vld [vmem:[%s295 + $0xc8] sm:$0xff]
        %v372 = vld [vmem:[%s295 + $0xd0] sm:$0xff]
        %v373 = vld [vmem:[%s295 + $0xd8] sm:$0xff]
        %v374 = vld [vmem:[%s295 + $0xe0] sm:$0xff]
        %v375 = vld [vmem:[%s295 + $0xe8] sm:$0xff]
        %v376 = vld [vmem:[%s295 + $0xf0] sm:$0xff]
        %v377 = vld [vmem:[%s295 + $0xf8] sm:$0xff]
        %v378 = vld [vmem:[%s295 + $0x100] sm:$0xff]
        %v379 = vld [vmem:[%s295 + $0x108] sm:$0xff]
        %v380 = vld [vmem:[%s295 + $0x110] sm:$0xff]
        %v381 = vld [vmem:[%s295 + $0x118] sm:$0xff]
        %v382 = vld [vmem:[%s295 + $0x120] sm:$0xff]
        %v383 = vld [vmem:[%s295 + $0x128] sm:$0xff]
        %v384 = vld [vmem:[%s295 + $0x130] sm:$0xff]
        %v385 = vld [vmem:[%s295 + $0x138] sm:$0xff]
        %v386 = vld [vmem:[%s295 + $0x140] sm:$0xff]
        %v387 = vld [vmem:[%s295 + $0x148] sm:$0xff]
        %v388 = vld [vmem:[%s295 + $0x150] sm:$0xff]
        %v389 = vld [vmem:[%s295 + $0x158] sm:$0xff]
        %v390 = vld [vmem:[%s295 + $0x160] sm:$0xff]
        %v391 = vld [vmem:[%s295 + $0x168] sm:$0xff]
        %v392 = vld [vmem:[%s295 + $0x170] sm:$0xff]
        %v393 = vld [vmem:[%s295 + $0x178] sm:$0xff]
        %v394 = vld [vmem:[%s295 + $0x180] sm:$0xff]
        %v395 = vld [vmem:[%s295 + $0x188] sm:$0xff]
        %v396 = vld [vmem:[%s295 + $0x190] sm:$0xff]
        %v397 = vld [vmem:[%s295 + $0x198] sm:$0xff]
        %v398 = vld [vmem:[%s295 + $0x1a0] sm:$0xff]
        %v399 = vld [vmem:[%s295 + $0x1a8] sm:$0xff]
        %v400 = vld [vmem:[%s295 + $0x1b0] sm:$0xff]
        %v401 = vld [vmem:[%s295 + $0x1b8] sm:$0xff]
        %v402 = vld [vmem:[%s295 + $0x1c0] sm:$0xff]
        %v403 = vld [vmem:[%s295 + $0x1c8] sm:$0xff]
        %v404 = vld [vmem:[%s295 + $0x1d0] sm:$0xff]
        %v405 = vld [vmem:[%s295 + $0x1d8] sm:$0xff]
        %v406 = vld [vmem:[%s295 + $0x1e0] sm:$0xff]
        %v407 = vld [vmem:[%s295 + $0x1e8] sm:$0xff]
        %v408 = vld [vmem:[%s295 + $0x1f0] sm:$0xff]
        %v409 = vld [vmem:[%s295 + $0x1f8] sm:$0xff]
        %v410 = vpack.c.bf16 %v348, %v346
        %v411 = vpack.c.bf16 %v349, %v347
        %v412 = vpack.c.bf16 %v352, %v350
        %v413 = vpack.c.bf16 %v353, %v351
        %v414 = vpack.c.bf16 %v356, %v354
        %v415 = vpack.c.bf16 %v357, %v355
        %v416 = vpack.c.bf16 %v360, %v358
        %v417 = vpack.c.bf16 %v361, %v359
        %v418 = vpack.c.bf16 %v364, %v362
        %v419 = vpack.c.bf16 %v365, %v363
        %v420 = vpack.c.bf16 %v368, %v366
        %v421 = vpack.c.bf16 %v369, %v367
        %v422 = vpack.c.bf16 %v372, %v370
        %v423 = vpack.c.bf16 %v373, %v371
        %v424 = vpack.c.bf16 %v376, %v374
        %v425 = vpack.c.bf16 %v377, %v375
        %v426 = vpack.c.bf16 %v380, %v378
        %v427 = vpack.c.bf16 %v381, %v379
        %v428 = vpack.c.bf16 %v384, %v382
        %v429 = vpack.c.bf16 %v385, %v383
        %v430 = vpack.c.bf16 %v388, %v386
        %v431 = vpack.c.bf16 %v389, %v387
        %v432 = vpack.c.bf16 %v392, %v390
        %v433 = vpack.c.bf16 %v393, %v391
        %v434 = vpack.c.bf16 %v396, %v394
        %v435 = vpack.c.bf16 %v397, %v395
        %v436 = vpack.c.bf16 %v400, %v398
        %v437 = vpack.c.bf16 %v401, %v399
        %v438 = vpack.c.bf16 %v404, %v402
        %v439 = vpack.c.bf16 %v405, %v403
        %v440 = vpack.c.bf16 %v408, %v406
        %v441 = vpack.c.bf16 %v409, %v407
        %v442 = vld [vmem:[#allocation5] sm:$0xff]
        %v443 = vld [vmem:[#allocation5 + $0x8] sm:$0xff]
        %v444 = vld [vmem:[#allocation5 + $0x10] sm:$0xff]
        %v445 = vld [vmem:[#allocation5 + $0x18] sm:$0xff]
        %v446 = vld [vmem:[#allocation5 + $0x20] sm:$0xff]
        %v447 = vld [vmem:[#allocation5 + $0x28] sm:$0xff]
        %v448 = vld [vmem:[#allocation5 + $0x30] sm:$0xff]
        %v449 = vld [vmem:[#allocation5 + $0x38] sm:$0xff]
        %v450 = vld [vmem:[#allocation5 + $0x40] sm:$0xff]
        %v451 = vld [vmem:[#allocation5 + $0x48] sm:$0xff]
        %v452 = vld [vmem:[#allocation5 + $0x50] sm:$0xff]
        %v453 = vld [vmem:[#allocation5 + $0x58] sm:$0xff]
        %v454 = vld [vmem:[#allocation5 + $0x60] sm:$0xff]
        %v455 = vld [vmem:[#allocation5 + $0x68] sm:$0xff]
        %v456 = vld [vmem:[#allocation5 + $0x70] sm:$0xff]
        %v457 = vld [vmem:[#allocation5 + $0x78] sm:$0xff]
        %v458 = vld [vmem:[#allocation5 + $0x80] sm:$0xff]
        %v459 = vld [vmem:[#allocation5 + $0x88] sm:$0xff]
        %v460 = vld [vmem:[#allocation5 + $0x90] sm:$0xff]
        %v461 = vld [vmem:[#allocation5 + $0x98] sm:$0xff]
        %v462 = vld [vmem:[#allocation5 + $0xa0] sm:$0xff]
        %v463 = vld [vmem:[#allocation5 + $0xa8] sm:$0xff]
        %v464 = vld [vmem:[#allocation5 + $0xb0] sm:$0xff]
        %v465 = vld [vmem:[#allocation5 + $0xb8] sm:$0xff]
        %v466 = vld [vmem:[#allocation5 + $0xc0] sm:$0xff]
        %v467 = vld [vmem:[#allocation5 + $0xc8] sm:$0xff]
        %v468 = vld [vmem:[#allocation5 + $0xd0] sm:$0xff]
        %v469 = vld [vmem:[#allocation5 + $0xd8] sm:$0xff]
        %v470 = vld [vmem:[#allocation5 + $0xe0] sm:$0xff]
        %v471 = vld [vmem:[#allocation5 + $0xe8] sm:$0xff]
        %v472 = vld [vmem:[#allocation5 + $0xf0] sm:$0xff]
        %v473 = vld [vmem:[#allocation5 + $0xf8] sm:$0xff]
        %v474 = vld [vmem:[%s2] sm:$0x3]
        %v476 = vlaneseq
        %v477 = vshrl.u32 %v476, 7
        %v478 = vsub.s32 0, %v477
        %v479 = vrot.slane %v474, %v478
        %v480 = vlaneseq
        %v481 = vshrl.u32 %v480, 7
        %v482 = vsub.s32 1, %v481
        %v483 = vrot.slane %v474, %v482
        %v518 = vunpack.c.l.b16 %v442
        %v519 = vunpack.c.h.b16 %v442
        %v520 = vunpack.c.l.b16 %v443
        %v521 = vunpack.c.h.b16 %v443
        %v522 = vunpack.c.l.b16 %v444
        %v523 = vunpack.c.h.b16 %v444
        %v524 = vunpack.c.l.b16 %v445
        %v525 = vunpack.c.h.b16 %v445
        %v526 = vunpack.c.l.b16 %v446
        %v527 = vunpack.c.h.b16 %v446
        %v528 = vunpack.c.l.b16 %v447
        %v529 = vunpack.c.h.b16 %v447
        %v530 = vunpack.c.l.b16 %v448
        %v531 = vunpack.c.h.b16 %v448
        %v532 = vunpack.c.l.b16 %v449
        %v533 = vunpack.c.h.b16 %v449
        %v534 = vunpack.c.l.b16 %v450
        %v535 = vunpack.c.h.b16 %v450
        %v536 = vunpack.c.l.b16 %v451
        %v537 = vunpack.c.h.b16 %v451
        %v538 = vunpack.c.l.b16 %v452
        %v539 = vunpack.c.h.b16 %v452
        %v540 = vunpack.c.l.b16 %v453
        %v541 = vunpack.c.h.b16 %v453
        %v542 = vunpack.c.l.b16 %v454
        %v543 = vunpack.c.h.b16 %v454
        %v544 = vunpack.c.l.b16 %v455
        %v545 = vunpack.c.h.b16 %v455
        %v546 = vunpack.c.l.b16 %v456
        %v547 = vunpack.c.h.b16 %v456
        %v548 = vunpack.c.l.b16 %v457
        %v549 = vunpack.c.h.b16 %v457
        %v550 = vunpack.c.l.b16 %v458
        %v551 = vunpack.c.h.b16 %v458
        %v552 = vunpack.c.l.b16 %v459
        %v553 = vunpack.c.h.b16 %v459
        %v554 = vunpack.c.l.b16 %v460
        %v555 = vunpack.c.h.b16 %v460
        %v556 = vunpack.c.l.b16 %v461
        %v557 = vunpack.c.h.b16 %v461
        %v558 = vunpack.c.l.b16 %v462
        %v559 = vunpack.c.h.b16 %v462
        %v560 = vunpack.c.l.b16 %v463
        %v561 = vunpack.c.h.b16 %v463
        %v562 = vunpack.c.l.b16 %v464
        %v563 = vunpack.c.h.b16 %v464
        %v564 = vunpack.c.l.b16 %v465
        %v565 = vunpack.c.h.b16 %v465
        %v566 = vunpack.c.l.b16 %v466
        %v567 = vunpack.c.h.b16 %v466
        %v568 = vunpack.c.l.b16 %v467
        %v569 = vunpack.c.h.b16 %v467
        %v570 = vunpack.c.l.b16 %v468
        %v571 = vunpack.c.h.b16 %v468
        %v572 = vunpack.c.l.b16 %v469
        %v573 = vunpack.c.h.b16 %v469
        %v574 = vunpack.c.l.b16 %v470
        %v575 = vunpack.c.h.b16 %v470
        %v576 = vunpack.c.l.b16 %v471
        %v577 = vunpack.c.h.b16 %v471
        %v578 = vunpack.c.l.b16 %v472
        %v579 = vunpack.c.h.b16 %v472
        %v580 = vunpack.c.l.b16 %v473
        %v581 = vunpack.c.h.b16 %v473
        %v582 = vpack.c.b16 %v520, %v518
        %v583 = vpack.c.b16 %v521, %v519
        %v584 = vpack.c.b16 %v524, %v522
        %v585 = vpack.c.b16 %v525, %v523
        %v586 = vpack.c.b16 %v528, %v526
        %v587 = vpack.c.b16 %v529, %v527
        %v588 = vpack.c.b16 %v532, %v530
        %v589 = vpack.c.b16 %v533, %v531
        %v590 = vpack.c.b16 %v536, %v534
        %v591 = vpack.c.b16 %v537, %v535
        %v592 = vpack.c.b16 %v540, %v538
        %v593 = vpack.c.b16 %v541, %v539
        %v594 = vpack.c.b16 %v544, %v542
        %v595 = vpack.c.b16 %v545, %v543
        %v596 = vpack.c.b16 %v548, %v546
        %v597 = vpack.c.b16 %v549, %v547
        %v598 = vpack.c.b16 %v552, %v550
        %v599 = vpack.c.b16 %v553, %v551
        %v600 = vpack.c.b16 %v556, %v554
        %v601 = vpack.c.b16 %v557, %v555
        %v602 = vpack.c.b16 %v560, %v558
        %v603 = vpack.c.b16 %v561, %v559
        %v604 = vpack.c.b16 %v564, %v562
        %v605 = vpack.c.b16 %v565, %v563
        %v606 = vpack.c.b16 %v568, %v566
        %v607 = vpack.c.b16 %v569, %v567
        %v608 = vpack.c.b16 %v572, %v570
        %v609 = vpack.c.b16 %v573, %v571
        %v610 = vpack.c.b16 %v576, %v574
        %v611 = vpack.c.b16 %v577, %v575
        %v612 = vpack.c.b16 %v580, %v578
        %v613 = vpack.c.b16 %v581, %v579
        %646 = vmatprep.subr.bf16.mxu0 %v583
        %647 = vmatpush1.bf16.msra.mxu0 %v582
        %648 = vmatprep.subr.bf16.mxu0 %v585
        %649 = vmatpush1.bf16.msra.mxu0 %v584
        %650 = vmatprep.subr.bf16.mxu0 %v587
        %651 = vmatpush1.bf16.msra.mxu0 %v586
        %652 = vmatprep.subr.bf16.mxu0 %v589
        %653 = vmatpush1.bf16.msra.mxu0 %v588
        %654 = vmatprep.subr.bf16.mxu0 %v591
        %655 = vmatpush1.bf16.msra.mxu0 %v590
        %656 = vmatprep.subr.bf16.mxu0 %v593
        %657 = vmatpush1.bf16.msra.mxu0 %v592
        %658 = vmatprep.subr.bf16.mxu0 %v595
        %659 = vmatpush1.bf16.msra.mxu0 %v594
        %660 = vmatprep.subr.bf16.mxu0 %v597
        %661 = vmatpush1.bf16.msra.mxu0 %v596
        %662 = vmatprep.subr.bf16.mxu0 %v599
        %663 = vmatpush1.bf16.msra.mxu0 %v598
        %664 = vmatprep.subr.bf16.mxu0 %v601
        %665 = vmatpush1.bf16.msra.mxu0 %v600
        %666 = vmatprep.subr.bf16.mxu0 %v603
        %667 = vmatpush1.bf16.msra.mxu0 %v602
        %668 = vmatprep.subr.bf16.mxu0 %v605
        %669 = vmatpush1.bf16.msra.mxu0 %v604
        %670 = vmatprep.subr.bf16.mxu0 %v607
        %671 = vmatpush1.bf16.msra.mxu0 %v606
        %672 = vmatprep.subr.bf16.mxu0 %v609
        %673 = vmatpush1.bf16.msra.mxu0 %v608
        %674 = vmatprep.subr.bf16.mxu0 %v611
        %675 = vmatpush1.bf16.msra.mxu0 %v610
        %676 = vmatprep.subr.bf16.mxu0 %v613
        %677 = vmatpush1.bf16.msra.mxu0 %v612
        %678 = vmatprep.mubr.bf16.mxu0 %v411
        %679 = vmatmul.mubr.bf16.gmra.mrb[0].mxu0 %v410
        %v680 = vpop.f32.mrb[0].mxu0
        %v681 = vadd.f32 %v479, %v680
        %v682 = vpop.f32.mrb[0].mxu0
        %v683 = vadd.f32 %v483, %v682
        %v684 = vpop.f32.mrb[0].mxu0
        %v685 = vadd.f32 %v479, %v684
        %v686 = vpop.f32.mrb[0].mxu0
        %v687 = vadd.f32 %v483, %v686
        %688 = vmatprep.mubr.bf16.mxu0 %v413
        %689 = vmatmul.mubr.bf16.gmra.mrb[0].mxu0 %v412
        %v690 = vpop.f32.mrb[0].mxu0
        %v691 = vadd.f32 %v479, %v690
        %v692 = vpop.f32.mrb[0].mxu0
        %v693 = vadd.f32 %v483, %v692
        %v694 = vpop.f32.mrb[0].mxu0
        %v695 = vadd.f32 %v479, %v694
        %v696 = vpop.f32.mrb[0].mxu0
        %v697 = vadd.f32 %v483, %v696
        %698 = vmatprep.mubr.bf16.mxu0 %v415
        %699 = vmatmul.mubr.bf16.gmra.mrb[0].mxu0 %v414
        %v700 = vpop.f32.mrb[0].mxu0
        %v701 = vadd.f32 %v479, %v700
        %v702 = vpop.f32.mrb[0].mxu0
        %v703 = vadd.f32 %v483, %v702
        %v704 = vpop.f32.mrb[0].mxu0
        %v705 = vadd.f32 %v479, %v704
        %v706 = vpop.f32.mrb[0].mxu0
        %v707 = vadd.f32 %v483, %v706
        %708 = vmatprep.mubr.bf16.mxu0 %v417
        %709 = vmatmul.mubr.bf16.gmra.mrb[0].mxu0 %v416
        %v710 = vpop.f32.mrb[0].mxu0
        %v711 = vadd.f32 %v479, %v710
        %v712 = vpop.f32.mrb[0].mxu0
        %v713 = vadd.f32 %v483, %v712
        %v714 = vpop.f32.mrb[0].mxu0
        %v715 = vadd.f32 %v479, %v714
        %v716 = vpop.f32.mrb[0].mxu0
        %v717 = vadd.f32 %v483, %v716
        %718 = vmatprep.mubr.bf16.mxu0 %v419
        %719 = vmatmul.mubr.bf16.gmra.mrb[0].mxu0 %v418
        %v720 = vpop.f32.mrb[0].mxu0
        %v721 = vadd.f32 %v479, %v720
        %v722 = vpop.f32.mrb[0].mxu0
        %v723 = vadd.f32 %v483, %v722
        %v724 = vpop.f32.mrb[0].mxu0
        %v725 = vadd.f32 %v479, %v724
        %v726 = vpop.f32.mrb[0].mxu0
        %v727 = vadd.f32 %v483, %v726
        %728 = vmatprep.mubr.bf16.mxu0 %v421
        %729 = vmatmul.mubr.bf16.gmra.mrb[0].mxu0 %v420
        %v730 = vpop.f32.mrb[0].mxu0
        %v731 = vadd.f32 %v479, %v730
        %v732 = vpop.f32.mrb[0].mxu0
        %v733 = vadd.f32 %v483, %v732
        %v734 = vpop.f32.mrb[0].mxu0
        %v735 = vadd.f32 %v479, %v734
        %v736 = vpop.f32.mrb[0].mxu0
        %v737 = vadd.f32 %v483, %v736
        %738 = vmatprep.mubr.bf16.mxu0 %v423
        %739 = vmatmul.mubr.bf16.gmra.mrb[0].mxu0 %v422
        %v740 = vpop.f32.mrb[0].mxu0
        %v741 = vadd.f32 %v479, %v740
        %v742 = vpop.f32.mrb[0].mxu0
        %v743 = vadd.f32 %v483, %v742
        %v744 = vpop.f32.mrb[0].mxu0
        %v745 = vadd.f32 %v479, %v744
        %v746 = vpop.f32.mrb[0].mxu0
        %v747 = vadd.f32 %v483, %v746
        %748 = vmatprep.mubr.bf16.mxu0 %v425
        %749 = vmatmul.mubr.bf16.gmra.mrb[0].mxu0 %v424
        %v750 = vpop.f32.mrb[0].mxu0
        %v751 = vadd.f32 %v479, %v750
        %v752 = vpop.f32.mrb[0].mxu0
        %v753 = vadd.f32 %v483, %v752
        %v754 = vpop.f32.mrb[0].mxu0
        %v755 = vadd.f32 %v479, %v754
        %v756 = vpop.f32.mrb[0].mxu0
        %v757 = vadd.f32 %v483, %v756
        %758 = vmatprep.mubr.bf16.mxu0 %v427
        %759 = vmatmul.mubr.bf16.gmra.mrb[0].mxu0 %v426
        %v760 = vpop.f32.mrb[0].mxu0
        %v761 = vadd.f32 %v479, %v760
        %v762 = vpop.f32.mrb[0].mxu0
        %v763 = vadd.f32 %v483, %v762
        %v764 = vpop.f32.mrb[0].mxu0
        %v765 = vadd.f32 %v479, %v764
        %v766 = vpop.f32.mrb[0].mxu0
        %v767 = vadd.f32 %v483, %v766
        %768 = vmatprep.mubr.bf16.mxu0 %v429
        %769 = vmatmul.mubr.bf16.gmra.mrb[0].mxu0 %v428
        %v770 = vpop.f32.mrb[0].mxu0
        %v771 = vadd.f32 %v479, %v770
        %v772 = vpop.f32.mrb[0].mxu0
        %v773 = vadd.f32 %v483, %v772
        %v774 = vpop.f32.mrb[0].mxu0
        %v775 = vadd.f32 %v479, %v774
        %v776 = vpop.f32.mrb[0].mxu0
        %v777 = vadd.f32 %v483, %v776
        %778 = vmatprep.mubr.bf16.mxu0 %v431
        %779 = vmatmul.mubr.bf16.gmra.mrb[0].mxu0 %v430
        %v780 = vpop.f32.mrb[0].mxu0
        %v781 = vadd.f32 %v479, %v780
        %v782 = vpop.f32.mrb[0].mxu0
        %v783 = vadd.f32 %v483, %v782
        %v784 = vpop.f32.mrb[0].mxu0
        %v785 = vadd.f32 %v479, %v784
        %v786 = vpop.f32.mrb[0].mxu0
        %v787 = vadd.f32 %v483, %v786
        %788 = vmatprep.mubr.bf16.mxu0 %v433
        %789 = vmatmul.mubr.bf16.gmra.mrb[0].mxu0 %v432
        %v790 = vpop.f32.mrb[0].mxu0
        %v791 = vadd.f32 %v479, %v790
        %v792 = vpop.f32.mrb[0].mxu0
        %v793 = vadd.f32 %v483, %v792
        %v794 = vpop.f32.mrb[0].mxu0
        %v795 = vadd.f32 %v479, %v794
        %v796 = vpop.f32.mrb[0].mxu0
        %v797 = vadd.f32 %v483, %v796
        %798 = vmatprep.mubr.bf16.mxu0 %v435
        %799 = vmatmul.mubr.bf16.gmra.mrb[0].mxu0 %v434
        %v800 = vpop.f32.mrb[0].mxu0
        %v801 = vadd.f32 %v479, %v800
        %v802 = vpop.f32.mrb[0].mxu0
        %v803 = vadd.f32 %v483, %v802
        %v804 = vpop.f32.mrb[0].mxu0
        %v805 = vadd.f32 %v479, %v804
        %v806 = vpop.f32.mrb[0].mxu0
        %v807 = vadd.f32 %v483, %v806
        %808 = vmatprep.mubr.bf16.mxu0 %v437
        %809 = vmatmul.mubr.bf16.gmra.mrb[0].mxu0 %v436
        %v810 = vpop.f32.mrb[0].mxu0
        %v811 = vadd.f32 %v479, %v810
        %v812 = vpop.f32.mrb[0].mxu0
        %v813 = vadd.f32 %v483, %v812
        %v814 = vpop.f32.mrb[0].mxu0
        %v815 = vadd.f32 %v479, %v814
        %v816 = vpop.f32.mrb[0].mxu0
        %v817 = vadd.f32 %v483, %v816
        %818 = vmatprep.mubr.bf16.mxu0 %v439
        %819 = vmatmul.mubr.bf16.gmra.mrb[0].mxu0 %v438
        %v820 = vpop.f32.mrb[0].mxu0
        %v821 = vadd.f32 %v479, %v820
        %v822 = vpop.f32.mrb[0].mxu0
        %v823 = vadd.f32 %v483, %v822
        %v824 = vpop.f32.mrb[0].mxu0
        %v825 = vadd.f32 %v479, %v824
        %v826 = vpop.f32.mrb[0].mxu0
        %v827 = vadd.f32 %v483, %v826
        %828 = vmatprep.mubr.bf16.mxu0 %v441
        %829 = vmatmul.mubr.bf16.gmra.mrb[0].mxu0 %v440
        %v830 = vpop.f32.mrb[0].mxu0
        %v831 = vadd.f32 %v479, %v830
        %v832 = vpop.f32.mrb[0].mxu0
        %v833 = vadd.f32 %v483, %v832
        %v834 = vpop.f32.mrb[0].mxu0
        %v835 = vadd.f32 %v479, %v834
        %v836 = vpop.f32.mrb[0].mxu0
        %v837 = vadd.f32 %v483, %v836
        %838 = vdwg.mxu0
        %v839 = vmax.f32 %v681, 0.0
        %v840 = vmax.f32 %v683, 0.0
        %v841 = vmax.f32 %v685, 0.0
        %v842 = vmax.f32 %v687, 0.0
        %v843 = vmax.f32 %v691, 0.0
        %v844 = vmax.f32 %v693, 0.0
        %v845 = vmax.f32 %v695, 0.0
        %v846 = vmax.f32 %v697, 0.0
        %v847 = vmax.f32 %v701, 0.0
        %v848 = vmax.f32 %v703, 0.0
        %v849 = vmax.f32 %v705, 0.0
        %v850 = vmax.f32 %v707, 0.0
        %v851 = vmax.f32 %v711, 0.0
        %v852 = vmax.f32 %v713, 0.0
        %v853 = vmax.f32 %v715, 0.0
        %v854 = vmax.f32 %v717, 0.0
        %v855 = vmax.f32 %v721, 0.0
        %v856 = vmax.f32 %v723, 0.0
        %v857 = vmax.f32 %v725, 0.0
        %v858 = vmax.f32 %v727, 0.0
        %v859 = vmax.f32 %v731, 0.0
        %v860 = vmax.f32 %v733, 0.0
        %v861 = vmax.f32 %v735, 0.0
        %v862 = vmax.f32 %v737, 0.0
        %v863 = vmax.f32 %v741, 0.0
        %v864 = vmax.f32 %v743, 0.0
        %v865 = vmax.f32 %v745, 0.0
        %v866 = vmax.f32 %v747, 0.0
        %v867 = vmax.f32 %v751, 0.0
        %v868 = vmax.f32 %v753, 0.0
        %v869 = vmax.f32 %v755, 0.0
        %v870 = vmax.f32 %v757, 0.0
        %v871 = vmax.f32 %v761, 0.0
        %v872 = vmax.f32 %v763, 0.0
        %v873 = vmax.f32 %v765, 0.0
        %v874 = vmax.f32 %v767, 0.0
        %v875 = vmax.f32 %v771, 0.0
        %v876 = vmax.f32 %v773, 0.0
        %v877 = vmax.f32 %v775, 0.0
        %v878 = vmax.f32 %v777, 0.0
        %v879 = vmax.f32 %v781, 0.0
        %v880 = vmax.f32 %v783, 0.0
        %v881 = vmax.f32 %v785, 0.0
        %v882 = vmax.f32 %v787, 0.0
        %v883 = vmax.f32 %v791, 0.0
        %v884 = vmax.f32 %v793, 0.0
        %v885 = vmax.f32 %v795, 0.0
        %v886 = vmax.f32 %v797, 0.0
        %v887 = vmax.f32 %v801, 0.0
        %v888 = vmax.f32 %v803, 0.0
        %v889 = vmax.f32 %v805, 0.0
        %v890 = vmax.f32 %v807, 0.0
        %v891 = vmax.f32 %v811, 0.0
        %v892 = vmax.f32 %v813, 0.0
        %v893 = vmax.f32 %v815, 0.0
        %v894 = vmax.f32 %v817, 0.0
        %v895 = vmax.f32 %v821, 0.0
        %v896 = vmax.f32 %v823, 0.0
        %v897 = vmax.f32 %v825, 0.0
        %v898 = vmax.f32 %v827, 0.0
        %v899 = vmax.f32 %v831, 0.0
        %v900 = vmax.f32 %v833, 0.0
        %v901 = vmax.f32 %v835, 0.0
        %v902 = vmax.f32 %v837, 0.0
        %v903 = vpack.c.bf16 %v841, %v839
        %v904 = vpack.c.bf16 %v842, %v840
        %v905 = vpack.c.bf16 %v845, %v843
        %v906 = vpack.c.bf16 %v846, %v844
        %v907 = vpack.c.bf16 %v849, %v847
        %v908 = vpack.c.bf16 %v850, %v848
        %v909 = vpack.c.bf16 %v853, %v851
        %v910 = vpack.c.bf16 %v854, %v852
        %v911 = vpack.c.bf16 %v857, %v855
        %v912 = vpack.c.bf16 %v858, %v856
        %v913 = vpack.c.bf16 %v861, %v859
        %v914 = vpack.c.bf16 %v862, %v860
        %v915 = vpack.c.bf16 %v865, %v863
        %v916 = vpack.c.bf16 %v866, %v864
        %v917 = vpack.c.bf16 %v869, %v867
        %v918 = vpack.c.bf16 %v870, %v868
        %v919 = vpack.c.bf16 %v873, %v871
        %v920 = vpack.c.bf16 %v874, %v872
        %v921 = vpack.c.bf16 %v877, %v875
        %v922 = vpack.c.bf16 %v878, %v876
        %v923 = vpack.c.bf16 %v881, %v879
        %v924 = vpack.c.bf16 %v882, %v880
        %v925 = vpack.c.bf16 %v885, %v883
        %v926 = vpack.c.bf16 %v886, %v884
        %v927 = vpack.c.bf16 %v889, %v887
        %v928 = vpack.c.bf16 %v890, %v888
        %v929 = vpack.c.bf16 %v893, %v891
        %v930 = vpack.c.bf16 %v894, %v892
        %v931 = vpack.c.bf16 %v897, %v895
        %v932 = vpack.c.bf16 %v898, %v896
        %v933 = vpack.c.bf16 %v901, %v899
        %v934 = vpack.c.bf16 %v902, %v900
        %v935 = vld [vmem:[#allocation7] sm:$0xff]
        %v936 = vld [vmem:[#allocation7 + $0x8] sm:$0xff]
        %v937 = vld [vmem:[#allocation7 + $0x10] sm:$0xff]
        %v938 = vld [vmem:[#allocation7 + $0x18] sm:$0xff]
        %v939 = vld [vmem:[#allocation7 + $0x20] sm:$0xff]
        %v940 = vld [vmem:[#allocation7 + $0x28] sm:$0xff]
        %v941 = vld [vmem:[#allocation7 + $0x30] sm:$0xff]
        %v942 = vld [vmem:[#allocation7 + $0x38] sm:$0xff]
        %v943 = vld [vmem:[#allocation7 + $0x40] sm:$0xff]
        %v944 = vld [vmem:[#allocation7 + $0x48] sm:$0xff]
        %v945 = vld [vmem:[#allocation7 + $0x50] sm:$0xff]
        %v946 = vld [vmem:[#allocation7 + $0x58] sm:$0xff]
        %v947 = vld [vmem:[#allocation7 + $0x60] sm:$0xff]
        %v948 = vld [vmem:[#allocation7 + $0x68] sm:$0xff]
        %v949 = vld [vmem:[#allocation7 + $0x70] sm:$0xff]
        %v950 = vld [vmem:[#allocation7 + $0x78] sm:$0xff]
        %v951 = vld [vmem:[#allocation7 + $0x80] sm:$0xff]
        %v952 = vld [vmem:[#allocation7 + $0x88] sm:$0xff]
        %v953 = vld [vmem:[#allocation7 + $0x90] sm:$0xff]
        %v954 = vld [vmem:[#allocation7 + $0x98] sm:$0xff]
        %v955 = vld [vmem:[#allocation7 + $0xa0] sm:$0xff]
        %v956 = vld [vmem:[#allocation7 + $0xa8] sm:$0xff]
        %v957 = vld [vmem:[#allocation7 + $0xb0] sm:$0xff]
        %v958 = vld [vmem:[#allocation7 + $0xb8] sm:$0xff]
        %v959 = vld [vmem:[#allocation7 + $0xc0] sm:$0xff]
        %v960 = vld [vmem:[#allocation7 + $0xc8] sm:$0xff]
        %v961 = vld [vmem:[#allocation7 + $0xd0] sm:$0xff]
        %v962 = vld [vmem:[#allocation7 + $0xd8] sm:$0xff]
        %v963 = vld [vmem:[#allocation7 + $0xe0] sm:$0xff]
        %v964 = vld [vmem:[#allocation7 + $0xe8] sm:$0xff]
        %v965 = vld [vmem:[#allocation7 + $0xf0] sm:$0xff]
        %v966 = vld [vmem:[#allocation7 + $0xf8] sm:$0xff]
        %v967 = vld [vmem:[%s4] sm:$0x3]
        %v969 = vlaneseq
        %v970 = vshrl.u32 %v969, 7
        %v971 = vsub.s32 0, %v970
        %v972 = vrot.slane %v967, %v971
        %v973 = vlaneseq
        %v974 = vshrl.u32 %v973, 7
        %v975 = vsub.s32 1, %v974
        %v976 = vrot.slane %v967, %v975
        %v1011 = vunpack.c.l.b16 %v935
        %v1012 = vunpack.c.h.b16 %v935
        %v1013 = vunpack.c.l.b16 %v936
        %v1014 = vunpack.c.h.b16 %v936
        %v1015 = vunpack.c.l.b16 %v937
        %v1016 = vunpack.c.h.b16 %v937
        %v1017 = vunpack.c.l.b16 %v938
        %v1018 = vunpack.c.h.b16 %v938
        %v1019 = vunpack.c.l.b16 %v939
        %v1020 = vunpack.c.h.b16 %v939
        %v1021 = vunpack.c.l.b16 %v940
        %v1022 = vunpack.c.h.b16 %v940
        %v1023 = vunpack.c.l.b16 %v941
        %v1024 = vunpack.c.h.b16 %v941
        %v1025 = vunpack.c.l.b16 %v942
        %v1026 = vunpack.c.h.b16 %v942
        %v1027 = vunpack.c.l.b16 %v943
        %v1028 = vunpack.c.h.b16 %v943
        %v1029 = vunpack.c.l.b16 %v944
        %v1030 = vunpack.c.h.b16 %v944
        %v1031 = vunpack.c.l.b16 %v945
        %v1032 = vunpack.c.h.b16 %v945
        %v1033 = vunpack.c.l.b16 %v946
        %v1034 = vunpack.c.h.b16 %v946
        %v1035 = vunpack.c.l.b16 %v947
        %v1036 = vunpack.c.h.b16 %v947
        %v1037 = vunpack.c.l.b16 %v948
        %v1038 = vunpack.c.h.b16 %v948
        %v1039 = vunpack.c.l.b16 %v949
        %v1040 = vunpack.c.h.b16 %v949
        %v1041 = vunpack.c.l.b16 %v950
        %v1042 = vunpack.c.h.b16 %v950
        %v1043 = vunpack.c.l.b16 %v951
        %v1044 = vunpack.c.h.b16 %v951
        %v1045 = vunpack.c.l.b16 %v952
        %v1046 = vunpack.c.h.b16 %v952
        %v1047 = vunpack.c.l.b16 %v953
        %v1048 = vunpack.c.h.b16 %v953
        %v1049 = vunpack.c.l.b16 %v954
        %v1050 = vunpack.c.h.b16 %v954
        %v1051 = vunpack.c.l.b16 %v955
        %v1052 = vunpack.c.h.b16 %v955
        %v1053 = vunpack.c.l.b16 %v956
        %v1054 = vunpack.c.h.b16 %v956
        %v1055 = vunpack.c.l.b16 %v957
        %v1056 = vunpack.c.h.b16 %v957
        %v1057 = vunpack.c.l.b16 %v958
        %v1058 = vunpack.c.h.b16 %v958
        %v1059 = vunpack.c.l.b16 %v959
        %v1060 = vunpack.c.h.b16 %v959
        %v1061 = vunpack.c.l.b16 %v960
        %v1062 = vunpack.c.h.b16 %v960
        %v1063 = vunpack.c.l.b16 %v961
        %v1064 = vunpack.c.h.b16 %v961
        %v1065 = vunpack.c.l.b16 %v962
        %v1066 = vunpack.c.h.b16 %v962
        %v1067 = vunpack.c.l.b16 %v963
        %v1068 = vunpack.c.h.b16 %v963
        %v1069 = vunpack.c.l.b16 %v964
        %v1070 = vunpack.c.h.b16 %v964
        %v1071 = vunpack.c.l.b16 %v965
        %v1072 = vunpack.c.h.b16 %v965
        %v1073 = vunpack.c.l.b16 %v966
        %v1074 = vunpack.c.h.b16 %v966
        %v1075 = vpack.c.b16 %v1013, %v1011
        %v1076 = vpack.c.b16 %v1014, %v1012
        %v1077 = vpack.c.b16 %v1017, %v1015
        %v1078 = vpack.c.b16 %v1018, %v1016
        %v1079 = vpack.c.b16 %v1021, %v1019
        %v1080 = vpack.c.b16 %v1022, %v1020
        %v1081 = vpack.c.b16 %v1025, %v1023
        %v1082 = vpack.c.b16 %v1026, %v1024
        %v1083 = vpack.c.b16 %v1029, %v1027
        %v1084 = vpack.c.b16 %v1030, %v1028
        %v1085 = vpack.c.b16 %v1033, %v1031
        %v1086 = vpack.c.b16 %v1034, %v1032
        %v1087 = vpack.c.b16 %v1037, %v1035
        %v1088 = vpack.c.b16 %v1038, %v1036
        %v1089 = vpack.c.b16 %v1041, %v1039
        %v1090 = vpack.c.b16 %v1042, %v1040
        %v1091 = vpack.c.b16 %v1045, %v1043
        %v1092 = vpack.c.b16 %v1046, %v1044
        %v1093 = vpack.c.b16 %v1049, %v1047
        %v1094 = vpack.c.b16 %v1050, %v1048
        %v1095 = vpack.c.b16 %v1053, %v1051
        %v1096 = vpack.c.b16 %v1054, %v1052
        %v1097 = vpack.c.b16 %v1057, %v1055
        %v1098 = vpack.c.b16 %v1058, %v1056
        %v1099 = vpack.c.b16 %v1061, %v1059
        %v1100 = vpack.c.b16 %v1062, %v1060
        %v1101 = vpack.c.b16 %v1065, %v1063
        %v1102 = vpack.c.b16 %v1066, %v1064
        %v1103 = vpack.c.b16 %v1069, %v1067
        %v1104 = vpack.c.b16 %v1070, %v1068
        %v1105 = vpack.c.b16 %v1073, %v1071
        %v1106 = vpack.c.b16 %v1074, %v1072
        %1139 = vmatprep.subr.bf16.mxu0 %v1076
        %1140 = vmatpush1.bf16.msra.mxu0 %v1075
        %1141 = vmatprep.subr.bf16.mxu0 %v1078
        %1142 = vmatpush1.bf16.msra.mxu0 %v1077
        %1143 = vmatprep.subr.bf16.mxu0 %v1080
        %1144 = vmatpush1.bf16.msra.mxu0 %v1079
        %1145 = vmatprep.subr.bf16.mxu0 %v1082
        %1146 = vmatpush1.bf16.msra.mxu0 %v1081
        %1147 = vmatprep.subr.bf16.mxu0 %v1084
        %1148 = vmatpush1.bf16.msra.mxu0 %v1083
        %1149 = vmatprep.subr.bf16.mxu0 %v1086
        %1150 = vmatpush1.bf16.msra.mxu0 %v1085
        %1151 = vmatprep.subr.bf16.mxu0 %v1088
        %1152 = vmatpush1.bf16.msra.mxu0 %v1087
        %1153 = vmatprep.subr.bf16.mxu0 %v1090
        %1154 = vmatpush1.bf16.msra.mxu0 %v1089
        %1155 = vmatprep.subr.bf16.mxu0 %v1092
        %1156 = vmatpush1.bf16.msra.mxu0 %v1091
        %1157 = vmatprep.subr.bf16.mxu0 %v1094
        %1158 = vmatpush1.bf16.msra.mxu0 %v1093
        %1159 = vmatprep.subr.bf16.mxu0 %v1096
        %1160 = vmatpush1.bf16.msra.mxu0 %v1095
        %1161 = vmatprep.subr.bf16.mxu0 %v1098
        %1162 = vmatpush1.bf16.msra.mxu0 %v1097
        %1163 = vmatprep.subr.bf16.mxu0 %v1100
        %1164 = vmatpush1.bf16.msra.mxu0 %v1099
        %1165 = vmatprep.subr.bf16.mxu0 %v1102
        %1166 = vmatpush1.bf16.msra.mxu0 %v1101
        %1167 = vmatprep.subr.bf16.mxu0 %v1104
        %1168 = vmatpush1.bf16.msra.mxu0 %v1103
        %1169 = vmatprep.subr.bf16.mxu0 %v1106
        %1170 = vmatpush1.bf16.msra.mxu0 %v1105
        %1171 = vmatprep.mubr.bf16.mxu0 %v904
        %1172 = vmatmul.mubr.bf16.gmra.mrb[0].mxu0 %v903
        %v1173 = vpop.f32.mrb[0].mxu0
        %v1174 = vadd.f32 %v972, %v1173
        %v1175 = vpop.f32.mrb[0].mxu0
        %v1176 = vadd.f32 %v976, %v1175
        %v1177 = vpop.f32.mrb[0].mxu0
        %v1178 = vadd.f32 %v972, %v1177
        %v1179 = vpop.f32.mrb[0].mxu0
        %v1180 = vadd.f32 %v976, %v1179
        %1181 = vmatprep.mubr.bf16.mxu0 %v906
        %1182 = vmatmul.mubr.bf16.gmra.mrb[0].mxu0 %v905
        %v1183 = vpop.f32.mrb[0].mxu0
        %v1184 = vadd.f32 %v972, %v1183
        %v1185 = vpop.f32.mrb[0].mxu0
        %v1186 = vadd.f32 %v976, %v1185
        %v1187 = vpop.f32.mrb[0].mxu0
        %v1188 = vadd.f32 %v972, %v1187
        %v1189 = vpop.f32.mrb[0].mxu0
        %v1190 = vadd.f32 %v976, %v1189
        %1191 = vmatprep.mubr.bf16.mxu0 %v908
        %1192 = vmatmul.mubr.bf16.gmra.mrb[0].mxu0 %v907
        %v1193 = vpop.f32.mrb[0].mxu0
        %v1194 = vadd.f32 %v972, %v1193
        %v1195 = vpop.f32.mrb[0].mxu0
        %v1196 = vadd.f32 %v976, %v1195
        %v1197 = vpop.f32.mrb[0].mxu0
        %v1198 = vadd.f32 %v972, %v1197
        %v1199 = vpop.f32.mrb[0].mxu0
        %v1200 = vadd.f32 %v976, %v1199
        %1201 = vmatprep.mubr.bf16.mxu0 %v910
        %1202 = vmatmul.mubr.bf16.gmra.mrb[0].mxu0 %v909
        %v1203 = vpop.f32.mrb[0].mxu0
        %v1204 = vadd.f32 %v972, %v1203
        %v1205 = vpop.f32.mrb[0].mxu0
        %v1206 = vadd.f32 %v976, %v1205
        %v1207 = vpop.f32.mrb[0].mxu0
        %v1208 = vadd.f32 %v972, %v1207
        %v1209 = vpop.f32.mrb[0].mxu0
        %v1210 = vadd.f32 %v976, %v1209
        %1211 = vmatprep.mubr.bf16.mxu0 %v912
        %1212 = vmatmul.mubr.bf16.gmra.mrb[0].mxu0 %v911
        %v1213 = vpop.f32.mrb[0].mxu0
        %v1214 = vadd.f32 %v972, %v1213
        %v1215 = vpop.f32.mrb[0].mxu0
        %v1216 = vadd.f32 %v976, %v1215
        %v1217 = vpop.f32.mrb[0].mxu0
        %v1218 = vadd.f32 %v972, %v1217
        %v1219 = vpop.f32.mrb[0].mxu0
        %v1220 = vadd.f32 %v976, %v1219
        %1221 = vmatprep.mubr.bf16.mxu0 %v914
        %1222 = vmatmul.mubr.bf16.gmra.mrb[0].mxu0 %v913
        %v1223 = vpop.f32.mrb[0].mxu0
        %v1224 = vadd.f32 %v972, %v1223
        %v1225 = vpop.f32.mrb[0].mxu0
        %v1226 = vadd.f32 %v976, %v1225
        %v1227 = vpop.f32.mrb[0].mxu0
        %v1228 = vadd.f32 %v972, %v1227
        %v1229 = vpop.f32.mrb[0].mxu0
        %v1230 = vadd.f32 %v976, %v1229
        %1231 = vmatprep.mubr.bf16.mxu0 %v916
        %1232 = vmatmul.mubr.bf16.gmra.mrb[0].mxu0 %v915
        %v1233 = vpop.f32.mrb[0].mxu0
        %v1234 = vadd.f32 %v972, %v1233
        %v1235 = vpop.f32.mrb[0].mxu0
        %v1236 = vadd.f32 %v976, %v1235
        %v1237 = vpop.f32.mrb[0].mxu0
        %v1238 = vadd.f32 %v972, %v1237
        %v1239 = vpop.f32.mrb[0].mxu0
        %v1240 = vadd.f32 %v976, %v1239
        %1241 = vmatprep.mubr.bf16.mxu0 %v918
        %1242 = vmatmul.mubr.bf16.gmra.mrb[0].mxu0 %v917
        %v1243 = vpop.f32.mrb[0].mxu0
        %v1244 = vadd.f32 %v972, %v1243
        %v1245 = vpop.f32.mrb[0].mxu0
        %v1246 = vadd.f32 %v976, %v1245
        %v1247 = vpop.f32.mrb[0].mxu0
        %v1248 = vadd.f32 %v972, %v1247
        %v1249 = vpop.f32.mrb[0].mxu0
        %v1250 = vadd.f32 %v976, %v1249
        %1251 = vmatprep.mubr.bf16.mxu0 %v920
        %1252 = vmatmul.mubr.bf16.gmra.mrb[0].mxu0 %v919
        %v1253 = vpop.f32.mrb[0].mxu0
        %v1254 = vadd.f32 %v972, %v1253
        %v1255 = vpop.f32.mrb[0].mxu0
        %v1256 = vadd.f32 %v976, %v1255
        %v1257 = vpop.f32.mrb[0].mxu0
        %v1258 = vadd.f32 %v972, %v1257
        %v1259 = vpop.f32.mrb[0].mxu0
        %v1260 = vadd.f32 %v976, %v1259
        %1261 = vmatprep.mubr.bf16.mxu0 %v922
        %1262 = vmatmul.mubr.bf16.gmra.mrb[0].mxu0 %v921
        %v1263 = vpop.f32.mrb[0].mxu0
        %v1264 = vadd.f32 %v972, %v1263
        %v1265 = vpop.f32.mrb[0].mxu0
        %v1266 = vadd.f32 %v976, %v1265
        %v1267 = vpop.f32.mrb[0].mxu0
        %v1268 = vadd.f32 %v972, %v1267
        %v1269 = vpop.f32.mrb[0].mxu0
        %v1270 = vadd.f32 %v976, %v1269
        %1271 = vmatprep.mubr.bf16.mxu0 %v924
        %1272 = vmatmul.mubr.bf16.gmra.mrb[0].mxu0 %v923
        %v1273 = vpop.f32.mrb[0].mxu0
        %v1274 = vadd.f32 %v972, %v1273
        %v1275 = vpop.f32.mrb[0].mxu0
        %v1276 = vadd.f32 %v976, %v1275
        %v1277 = vpop.f32.mrb[0].mxu0
        %v1278 = vadd.f32 %v972, %v1277
        %v1279 = vpop.f32.mrb[0].mxu0
        %v1280 = vadd.f32 %v976, %v1279
        %1281 = vmatprep.mubr.bf16.mxu0 %v926
        %1282 = vmatmul.mubr.bf16.gmra.mrb[0].mxu0 %v925
        %v1283 = vpop.f32.mrb[0].mxu0
        %v1284 = vadd.f32 %v972, %v1283
        %v1285 = vpop.f32.mrb[0].mxu0
        %v1286 = vadd.f32 %v976, %v1285
        %v1287 = vpop.f32.mrb[0].mxu0
        %v1288 = vadd.f32 %v972, %v1287
        %v1289 = vpop.f32.mrb[0].mxu0
        %v1290 = vadd.f32 %v976, %v1289
        %1291 = vmatprep.mubr.bf16.mxu0 %v928
        %1292 = vmatmul.mubr.bf16.gmra.mrb[0].mxu0 %v927
        %v1293 = vpop.f32.mrb[0].mxu0
        %v1294 = vadd.f32 %v972, %v1293
        %v1295 = vpop.f32.mrb[0].mxu0
        %v1296 = vadd.f32 %v976, %v1295
        %v1297 = vpop.f32.mrb[0].mxu0
        %v1298 = vadd.f32 %v972, %v1297
        %v1299 = vpop.f32.mrb[0].mxu0
        %v1300 = vadd.f32 %v976, %v1299
        %1301 = vmatprep.mubr.bf16.mxu0 %v930
        %1302 = vmatmul.mubr.bf16.gmra.mrb[0].mxu0 %v929
        %v1303 = vpop.f32.mrb[0].mxu0
        %v1304 = vadd.f32 %v972, %v1303
        %v1305 = vpop.f32.mrb[0].mxu0
        %v1306 = vadd.f32 %v976, %v1305
        %v1307 = vpop.f32.mrb[0].mxu0
        %v1308 = vadd.f32 %v972, %v1307
        %v1309 = vpop.f32.mrb[0].mxu0
        %v1310 = vadd.f32 %v976, %v1309
        %1311 = vmatprep.mubr.bf16.mxu0 %v932
        %1312 = vmatmul.mubr.bf16.gmra.mrb[0].mxu0 %v931
        %v1313 = vpop.f32.mrb[0].mxu0
        %v1314 = vadd.f32 %v972, %v1313
        %v1315 = vpop.f32.mrb[0].mxu0
        %v1316 = vadd.f32 %v976, %v1315
        %v1317 = vpop.f32.mrb[0].mxu0
        %v1318 = vadd.f32 %v972, %v1317
        %v1319 = vpop.f32.mrb[0].mxu0
        %v1320 = vadd.f32 %v976, %v1319
        %1321 = vmatprep.mubr.bf16.mxu0 %v934
        %1322 = vmatmul.mubr.bf16.gmra.mrb[0].mxu0 %v933
        %v1323 = vpop.f32.mrb[0].mxu0
        %v1324 = vadd.f32 %v972, %v1323
        %v1325 = vpop.f32.mrb[0].mxu0
        %v1326 = vadd.f32 %v976, %v1325
        %v1327 = vpop.f32.mrb[0].mxu0
        %v1328 = vadd.f32 %v972, %v1327
        %v1329 = vpop.f32.mrb[0].mxu0
        %v1330 = vadd.f32 %v976, %v1329
        %1331 = vdwg.mxu0
        %v1332 = vadd.f32 %v346, %v1174
        %v1333 = vadd.f32 %v347, %v1176
        %v1334 = vadd.f32 %v348, %v1178
        %v1335 = vadd.f32 %v349, %v1180
        %v1336 = vadd.f32 %v350, %v1184
        %v1337 = vadd.f32 %v351, %v1186
        %v1338 = vadd.f32 %v352, %v1188
        %v1339 = vadd.f32 %v353, %v1190
        %v1340 = vadd.f32 %v354, %v1194
        %v1341 = vadd.f32 %v355, %v1196
        %v1342 = vadd.f32 %v356, %v1198
        %v1343 = vadd.f32 %v357, %v1200
        %v1344 = vadd.f32 %v358, %v1204
        %v1345 = vadd.f32 %v359, %v1206
        %v1346 = vadd.f32 %v360, %v1208
        %v1347 = vadd.f32 %v361, %v1210
        %v1348 = vadd.f32 %v362, %v1214
        %v1349 = vadd.f32 %v363, %v1216
        %v1350 = vadd.f32 %v364, %v1218
        %v1351 = vadd.f32 %v365, %v1220
        %v1352 = vadd.f32 %v366, %v1224
        %v1353 = vadd.f32 %v367, %v1226
        %v1354 = vadd.f32 %v368, %v1228
        %v1355 = vadd.f32 %v369, %v1230
        %v1356 = vadd.f32 %v370, %v1234
        %v1357 = vadd.f32 %v371, %v1236
        %v1358 = vadd.f32 %v372, %v1238
        %v1359 = vadd.f32 %v373, %v1240
        %v1360 = vadd.f32 %v374, %v1244
        %v1361 = vadd.f32 %v375, %v1246
        %v1362 = vadd.f32 %v376, %v1248
        %v1363 = vadd.f32 %v377, %v1250
        %v1364 = vadd.f32 %v378, %v1254
        %v1365 = vadd.f32 %v379, %v1256
        %v1366 = vadd.f32 %v380, %v1258
        %v1367 = vadd.f32 %v381, %v1260
        %v1368 = vadd.f32 %v382, %v1264
        %v1369 = vadd.f32 %v383, %v1266
        %v1370 = vadd.f32 %v384, %v1268
        %v1371 = vadd.f32 %v385, %v1270
        %v1372 = vadd.f32 %v386, %v1274
        %v1373 = vadd.f32 %v387, %v1276
        %v1374 = vadd.f32 %v388, %v1278
        %v1375 = vadd.f32 %v389, %v1280
        %v1376 = vadd.f32 %v390, %v1284
        %v1377 = vadd.f32 %v391, %v1286
        %v1378 = vadd.f32 %v392, %v1288
        %v1379 = vadd.f32 %v393, %v1290
        %v1380 = vadd.f32 %v394, %v1294
        %v1381 = vadd.f32 %v395, %v1296
        %v1382 = vadd.f32 %v396, %v1298
        %v1383 = vadd.f32 %v397, %v1300
        %v1384 = vadd.f32 %v398, %v1304
        %v1385 = vadd.f32 %v399, %v1306
        %v1386 = vadd.f32 %v400, %v1308
        %v1387 = vadd.f32 %v401, %v1310
        %v1388 = vadd.f32 %v402, %v1314
        %v1389 = vadd.f32 %v403, %v1316
        %v1390 = vadd.f32 %v404, %v1318
        %v1391 = vadd.f32 %v405, %v1320
        %v1392 = vadd.f32 %v406, %v1324
        %v1393 = vadd.f32 %v407, %v1326
        %v1394 = vadd.f32 %v408, %v1328
        %v1395 = vadd.f32 %v409, %v1330
        %v1396 = vadd.f32 %v1332, %v1333
        %1397 = vadd.xlane.f32.xlu0 %v1396
        %v1398 = vpop.xlane.xlu0 %1397
        %v1399 = vadd.f32 %v1334, %v1335
        %1400 = vadd.xlane.f32.xlu0 %v1399
        %v1401 = vpop.xlane.xlu0 %1400
        %v1402 = vadd.f32 %v1336, %v1337
        %1403 = vadd.xlane.f32.xlu0 %v1402
        %v1404 = vpop.xlane.xlu0 %1403
        %v1405 = vadd.f32 %v1338, %v1339
        %1406 = vadd.xlane.f32.xlu0 %v1405
        %v1407 = vpop.xlane.xlu0 %1406
        %v1408 = vadd.f32 %v1340, %v1341
        %1409 = vadd.xlane.f32.xlu0 %v1408
        %v1410 = vpop.xlane.xlu0 %1409
        %v1411 = vadd.f32 %v1342, %v1343
        %1412 = vadd.xlane.f32.xlu0 %v1411
        %v1413 = vpop.xlane.xlu0 %1412
        %v1414 = vadd.f32 %v1344, %v1345
        %1415 = vadd.xlane.f32.xlu0 %v1414
        %v1416 = vpop.xlane.xlu0 %1415
        %v1417 = vadd.f32 %v1346, %v1347
        %1418 = vadd.xlane.f32.xlu0 %v1417
        %v1419 = vpop.xlane.xlu0 %1418
        %v1420 = vadd.f32 %v1348, %v1349
        %1421 = vadd.xlane.f32.xlu0 %v1420
        %v1422 = vpop.xlane.xlu0 %1421
        %v1423 = vadd.f32 %v1350, %v1351
        %1424 = vadd.xlane.f32.xlu0 %v1423
        %v1425 = vpop.xlane.xlu0 %1424
        %v1426 = vadd.f32 %v1352, %v1353
        %1427 = vadd.xlane.f32.xlu0 %v1426
        %v1428 = vpop.xlane.xlu0 %1427
        %v1429 = vadd.f32 %v1354, %v1355
        %1430 = vadd.xlane.f32.xlu0 %v1429
        %v1431 = vpop.xlane.xlu0 %1430
        %v1432 = vadd.f32 %v1356, %v1357
        %1433 = vadd.xlane.f32.xlu0 %v1432
        %v1434 = vpop.xlane.xlu0 %1433
        %v1435 = vadd.f32 %v1358, %v1359
        %1436 = vadd.xlane.f32.xlu0 %v1435
        %v1437 = vpop.xlane.xlu0 %1436
        %v1438 = vadd.f32 %v1360, %v1361
        %1439 = vadd.xlane.f32.xlu0 %v1438
        %v1440 = vpop.xlane.xlu0 %1439
        %v1441 = vadd.f32 %v1362, %v1363
        %1442 = vadd.xlane.f32.xlu0 %v1441
        %v1443 = vpop.xlane.xlu0 %1442
        %v1444 = vadd.f32 %v1364, %v1365
        %1445 = vadd.xlane.f32.xlu0 %v1444
        %v1446 = vpop.xlane.xlu0 %1445
        %v1447 = vadd.f32 %v1366, %v1367
        %1448 = vadd.xlane.f32.xlu0 %v1447
        %v1449 = vpop.xlane.xlu0 %1448
        %v1450 = vadd.f32 %v1368, %v1369
        %1451 = vadd.xlane.f32.xlu0 %v1450
        %v1452 = vpop.xlane.xlu0 %1451
        %v1453 = vadd.f32 %v1370, %v1371
        %1454 = vadd.xlane.f32.xlu0 %v1453
        %v1455 = vpop.xlane.xlu0 %1454
        %v1456 = vadd.f32 %v1372, %v1373
        %1457 = vadd.xlane.f32.xlu0 %v1456
        %v1458 = vpop.xlane.xlu0 %1457
        %v1459 = vadd.f32 %v1374, %v1375
        %1460 = vadd.xlane.f32.xlu0 %v1459
        %v1461 = vpop.xlane.xlu0 %1460
        %v1462 = vadd.f32 %v1376, %v1377
        %1463 = vadd.xlane.f32.xlu0 %v1462
        %v1464 = vpop.xlane.xlu0 %1463
        %v1465 = vadd.f32 %v1378, %v1379
        %1466 = vadd.xlane.f32.xlu0 %v1465
        %v1467 = vpop.xlane.xlu0 %1466
        %v1468 = vadd.f32 %v1380, %v1381
        %1469 = vadd.xlane.f32.xlu0 %v1468
        %v1470 = vpop.xlane.xlu0 %1469
        %v1471 = vadd.f32 %v1382, %v1383
        %1472 = vadd.xlane.f32.xlu0 %v1471
        %v1473 = vpop.xlane.xlu0 %1472
        %v1474 = vadd.f32 %v1384, %v1385
        %1475 = vadd.xlane.f32.xlu0 %v1474
        %v1476 = vpop.xlane.xlu0 %1475
        %v1477 = vadd.f32 %v1386, %v1387
        %1478 = vadd.xlane.f32.xlu0 %v1477
        %v1479 = vpop.xlane.xlu0 %1478
        %v1480 = vadd.f32 %v1388, %v1389
        %1481 = vadd.xlane.f32.xlu0 %v1480
        %v1482 = vpop.xlane.xlu0 %1481
        %v1483 = vadd.f32 %v1390, %v1391
        %1484 = vadd.xlane.f32.xlu0 %v1483
        %v1485 = vpop.xlane.xlu0 %1484
        %v1486 = vadd.f32 %v1392, %v1393
        %1487 = vadd.xlane.f32.xlu0 %v1486
        %v1488 = vpop.xlane.xlu0 %1487
        %v1489 = vadd.f32 %v1394, %v1395
        %1490 = vadd.xlane.f32.xlu0 %v1489
        %v1491 = vpop.xlane.xlu0 %1490
        %v1492 = vrcp.pop 256.0
        %v1493 = vmul.f32 %v1398, %v1492
        %v1494 = vmul.f32 %v1401, %v1492
        %v1495 = vmul.f32 %v1404, %v1492
        %v1496 = vmul.f32 %v1407, %v1492
        %v1497 = vmul.f32 %v1410, %v1492
        %v1498 = vmul.f32 %v1413, %v1492
        %v1499 = vmul.f32 %v1416, %v1492
        %v1500 = vmul.f32 %v1419, %v1492
        %v1501 = vmul.f32 %v1422, %v1492
        %v1502 = vmul.f32 %v1425, %v1492
        %v1503 = vmul.f32 %v1428, %v1492
        %v1504 = vmul.f32 %v1431, %v1492
        %v1505 = vmul.f32 %v1434, %v1492
        %v1506 = vmul.f32 %v1437, %v1492
        %v1507 = vmul.f32 %v1440, %v1492
        %v1508 = vmul.f32 %v1443, %v1492
        %v1509 = vmul.f32 %v1446, %v1492
        %v1510 = vmul.f32 %v1449, %v1492
        %v1511 = vmul.f32 %v1452, %v1492
        %v1512 = vmul.f32 %v1455, %v1492
        %v1513 = vmul.f32 %v1458, %v1492
        %v1514 = vmul.f32 %v1461, %v1492
        %v1515 = vmul.f32 %v1464, %v1492
        %v1516 = vmul.f32 %v1467, %v1492
        %v1517 = vmul.f32 %v1470, %v1492
        %v1518 = vmul.f32 %v1473, %v1492
        %v1519 = vmul.f32 %v1476, %v1492
        %v1520 = vmul.f32 %v1479, %v1492
        %v1521 = vmul.f32 %v1482, %v1492
        %v1522 = vmul.f32 %v1485, %v1492
        %v1523 = vmul.f32 %v1488, %v1492
        %v1524 = vmul.f32 %v1491, %v1492
        %v1525 = vsub.f32 %v1332, %v1493
        %v1526 = vsub.f32 %v1333, %v1493
        %v1527 = vsub.f32 %v1334, %v1494
        %v1528 = vsub.f32 %v1335, %v1494
        %v1529 = vsub.f32 %v1336, %v1495
        %v1530 = vsub.f32 %v1337, %v1495
        %v1531 = vsub.f32 %v1338, %v1496
        %v1532 = vsub.f32 %v1339, %v1496
        %v1533 = vsub.f32 %v1340, %v1497
        %v1534 = vsub.f32 %v1341, %v1497
        %v1535 = vsub.f32 %v1342, %v1498
        %v1536 = vsub.f32 %v1343, %v1498
        %v1537 = vsub.f32 %v1344, %v1499
        %v1538 = vsub.f32 %v1345, %v1499
        %v1539 = vsub.f32 %v1346, %v1500
        %v1540 = vsub.f32 %v1347, %v1500
        %v1541 = vsub.f32 %v1348, %v1501
        %v1542 = vsub.f32 %v1349, %v1501
        %v1543 = vsub.f32 %v1350, %v1502
        %v1544 = vsub.f32 %v1351, %v1502
        %v1545 = vsub.f32 %v1352, %v1503
        %v1546 = vsub.f32 %v1353, %v1503
        %v1547 = vsub.f32 %v1354, %v1504
        %v1548 = vsub.f32 %v1355, %v1504
        %v1549 = vsub.f32 %v1356, %v1505
        %v1550 = vsub.f32 %v1357, %v1505
        %v1551 = vsub.f32 %v1358, %v1506
        %v1552 = vsub.f32 %v1359, %v1506
        %v1553 = vsub.f32 %v1360, %v1507
        %v1554 = vsub.f32 %v1361, %v1507
        %v1555 = vsub.f32 %v1362, %v1508
        %v1556 = vsub.f32 %v1363, %v1508
        %v1557 = vsub.f32 %v1364, %v1509
        %v1558 = vsub.f32 %v1365, %v1509
        %v1559 = vsub.f32 %v1366, %v1510
        %v1560 = vsub.f32 %v1367, %v1510
        %v1561 = vsub.f32 %v1368, %v1511
        %v1562 = vsub.f32 %v1369, %v1511
        %v1563 = vsub.f32 %v1370, %v1512
        %v1564 = vsub.f32 %v1371, %v1512
        %v1565 = vsub.f32 %v1372, %v1513
        %v1566 = vsub.f32 %v1373, %v1513
        %v1567 = vsub.f32 %v1374, %v1514
        %v1568 = vsub.f32 %v1375, %v1514
        %v1569 = vsub.f32 %v1376, %v1515
        %v1570 = vsub.f32 %v1377, %v1515
        %v1571 = vsub.f32 %v1378, %v1516
        %v1572 = vsub.f32 %v1379, %v1516
        %v1573 = vsub.f32 %v1380, %v1517
        %v1574 = vsub.f32 %v1381, %v1517
        %v1575 = vsub.f32 %v1382, %v1518
        %v1576 = vsub.f32 %v1383, %v1518
        %v1577 = vsub.f32 %v1384, %v1519
        %v1578 = vsub.f32 %v1385, %v1519
        %v1579 = vsub.f32 %v1386, %v1520
        %v1580 = vsub.f32 %v1387, %v1520
        %v1581 = vsub.f32 %v1388, %v1521
        %v1582 = vsub.f32 %v1389, %v1521
        %v1583 = vsub.f32 %v1390, %v1522
        %v1584 = vsub.f32 %v1391, %v1522
        %v1585 = vsub.f32 %v1392, %v1523
        %v1586 = vsub.f32 %v1393, %v1523
        %v1587 = vsub.f32 %v1394, %v1524
        %v1588 = vsub.f32 %v1395, %v1524
        %v1589 = vmul.f32 %v1525, %v1525
        %v1590 = vmul.f32 %v1526, %v1526
        %v1591 = vmul.f32 %v1527, %v1527
        %v1592 = vmul.f32 %v1528, %v1528
        %v1593 = vmul.f32 %v1529, %v1529
        %v1594 = vmul.f32 %v1530, %v1530
        %v1595 = vmul.f32 %v1531, %v1531
        %v1596 = vmul.f32 %v1532, %v1532
        %v1597 = vmul.f32 %v1533, %v1533
        %v1598 = vmul.f32 %v1534, %v1534
        %v1599 = vmul.f32 %v1535, %v1535
        %v1600 = vmul.f32 %v1536, %v1536
        %v1601 = vmul.f32 %v1537, %v1537
        %v1602 = vmul.f32 %v1538, %v1538
        %v1603 = vmul.f32 %v1539, %v1539
        %v1604 = vmul.f32 %v1540, %v1540
        %v1605 = vmul.f32 %v1541, %v1541
        %v1606 = vmul.f32 %v1542, %v1542
        %v1607 = vmul.f32 %v1543, %v1543
        %v1608 = vmul.f32 %v1544, %v1544
        %v1609 = vmul.f32 %v1545, %v1545
        %v1610 = vmul.f32 %v1546, %v1546
        %v1611 = vmul.f32 %v1547, %v1547
        %v1612 = vmul.f32 %v1548, %v1548
        %v1613 = vmul.f32 %v1549, %v1549
        %v1614 = vmul.f32 %v1550, %v1550
        %v1615 = vmul.f32 %v1551, %v1551
        %v1616 = vmul.f32 %v1552, %v1552
        %v1617 = vmul.f32 %v1553, %v1553
        %v1618 = vmul.f32 %v1554, %v1554
        %v1619 = vmul.f32 %v1555, %v1555
        %v1620 = vmul.f32 %v1556, %v1556
        %v1621 = vmul.f32 %v1557, %v1557
        %v1622 = vmul.f32 %v1558, %v1558
        %v1623 = vmul.f32 %v1559, %v1559
        %v1624 = vmul.f32 %v1560, %v1560
        %v1625 = vmul.f32 %v1561, %v1561
        %v1626 = vmul.f32 %v1562, %v1562
        %v1627 = vmul.f32 %v1563, %v1563
        %v1628 = vmul.f32 %v1564, %v1564
        %v1629 = vmul.f32 %v1565, %v1565
        %v1630 = vmul.f32 %v1566, %v1566
        %v1631 = vmul.f32 %v1567, %v1567
        %v1632 = vmul.f32 %v1568, %v1568
        %v1633 = vmul.f32 %v1569, %v1569
        %v1634 = vmul.f32 %v1570, %v1570
        %v1635 = vmul.f32 %v1571, %v1571
        %v1636 = vmul.f32 %v1572, %v1572
        %v1637 = vmul.f32 %v1573, %v1573
        %v1638 = vmul.f32 %v1574, %v1574
        %v1639 = vmul.f32 %v1575, %v1575
        %v1640 = vmul.f32 %v1576, %v1576
        %v1641 = vmul.f32 %v1577, %v1577
        %v1642 = vmul.f32 %v1578, %v1578
        %v1643 = vmul.f32 %v1579, %v1579
        %v1644 = vmul.f32 %v1580, %v1580
        %v1645 = vmul.f32 %v1581, %v1581
        %v1646 = vmul.f32 %v1582, %v1582
        %v1647 = vmul.f32 %v1583, %v1583
        %v1648 = vmul.f32 %v1584, %v1584
        %v1649 = vmul.f32 %v1585, %v1585
        %v1650 = vmul.f32 %v1586, %v1586
        %v1651 = vmul.f32 %v1587, %v1587
        %v1652 = vmul.f32 %v1588, %v1588
        %v1653 = vadd.f32 %v1589, %v1590
        %1654 = vadd.xlane.f32.xlu0 %v1653
        %v1655 = vpop.xlane.xlu0 %1654
        %v1656 = vadd.f32 %v1591, %v1592
        %1657 = vadd.xlane.f32.xlu0 %v1656
        %v1658 = vpop.xlane.xlu0 %1657
        %v1659 = vadd.f32 %v1593, %v1594
        %1660 = vadd.xlane.f32.xlu0 %v1659
        %v1661 = vpop.xlane.xlu0 %1660
        %v1662 = vadd.f32 %v1595, %v1596
        %1663 = vadd.xlane.f32.xlu0 %v1662
        %v1664 = vpop.xlane.xlu0 %1663
        %v1665 = vadd.f32 %v1597, %v1598
        %1666 = vadd.xlane.f32.xlu0 %v1665
        %v1667 = vpop.xlane.xlu0 %1666
        %v1668 = vadd.f32 %v1599, %v1600
        %1669 = vadd.xlane.f32.xlu0 %v1668
        %v1670 = vpop.xlane.xlu0 %1669
        %v1671 = vadd.f32 %v1601, %v1602
        %1672 = vadd.xlane.f32.xlu0 %v1671
        %v1673 = vpop.xlane.xlu0 %1672
        %v1674 = vadd.f32 %v1603, %v1604
        %1675 = vadd.xlane.f32.xlu0 %v1674
        %v1676 = vpop.xlane.xlu0 %1675
        %v1677 = vadd.f32 %v1605, %v1606
        %1678 = vadd.xlane.f32.xlu0 %v1677
        %v1679 = vpop.xlane.xlu0 %1678
        %v1680 = vadd.f32 %v1607, %v1608
        %1681 = vadd.xlane.f32.xlu0 %v1680
        %v1682 = vpop.xlane.xlu0 %1681
        %v1683 = vadd.f32 %v1609, %v1610
        %1684 = vadd.xlane.f32.xlu0 %v1683
        %v1685 = vpop.xlane.xlu0 %1684
        %v1686 = vadd.f32 %v1611, %v1612
        %1687 = vadd.xlane.f32.xlu0 %v1686
        %v1688 = vpop.xlane.xlu0 %1687
        %v1689 = vadd.f32 %v1613, %v1614
        %1690 = vadd.xlane.f32.xlu0 %v1689
        %v1691 = vpop.xlane.xlu0 %1690
        %v1692 = vadd.f32 %v1615, %v1616
        %1693 = vadd.xlane.f32.xlu0 %v1692
        %v1694 = vpop.xlane.xlu0 %1693
        %v1695 = vadd.f32 %v1617, %v1618
        %1696 = vadd.xlane.f32.xlu0 %v1695
        %v1697 = vpop.xlane.xlu0 %1696
        %v1698 = vadd.f32 %v1619, %v1620
        %1699 = vadd.xlane.f32.xlu0 %v1698
        %v1700 = vpop.xlane.xlu0 %1699
        %v1701 = vadd.f32 %v1621, %v1622
        %1702 = vadd.xlane.f32.xlu0 %v1701
        %v1703 = vpop.xlane.xlu0 %1702
        %v1704 = vadd.f32 %v1623, %v1624
        %1705 = vadd.xlane.f32.xlu0 %v1704
        %v1706 = vpop.xlane.xlu0 %1705
        %v1707 = vadd.f32 %v1625, %v1626
        %1708 = vadd.xlane.f32.xlu0 %v1707
        %v1709 = vpop.xlane.xlu0 %1708
        %v1710 = vadd.f32 %v1627, %v1628
        %1711 = vadd.xlane.f32.xlu0 %v1710
        %v1712 = vpop.xlane.xlu0 %1711
        %v1713 = vadd.f32 %v1629, %v1630
        %1714 = vadd.xlane.f32.xlu0 %v1713
        %v1715 = vpop.xlane.xlu0 %1714
        %v1716 = vadd.f32 %v1631, %v1632
        %1717 = vadd.xlane.f32.xlu0 %v1716
        %v1718 = vpop.xlane.xlu0 %1717
        %v1719 = vadd.f32 %v1633, %v1634
        %1720 = vadd.xlane.f32.xlu0 %v1719
        %v1721 = vpop.xlane.xlu0 %1720
        %v1722 = vadd.f32 %v1635, %v1636
        %1723 = vadd.xlane.f32.xlu0 %v1722
        %v1724 = vpop.xlane.xlu0 %1723
        %v1725 = vadd.f32 %v1637, %v1638
        %1726 = vadd.xlane.f32.xlu0 %v1725
        %v1727 = vpop.xlane.xlu0 %1726
        %v1728 = vadd.f32 %v1639, %v1640
        %1729 = vadd.xlane.f32.xlu0 %v1728
        %v1730 = vpop.xlane.xlu0 %1729
        %v1731 = vadd.f32 %v1641, %v1642
        %1732 = vadd.xlane.f32.xlu0 %v1731
        %v1733 = vpop.xlane.xlu0 %1732
        %v1734 = vadd.f32 %v1643, %v1644
        %1735 = vadd.xlane.f32.xlu0 %v1734
        %v1736 = vpop.xlane.xlu0 %1735
        %v1737 = vadd.f32 %v1645, %v1646
        %1738 = vadd.xlane.f32.xlu0 %v1737
        %v1739 = vpop.xlane.xlu0 %1738
        %v1740 = vadd.f32 %v1647, %v1648
        %1741 = vadd.xlane.f32.xlu0 %v1740
        %v1742 = vpop.xlane.xlu0 %1741
        %v1743 = vadd.f32 %v1649, %v1650
        %1744 = vadd.xlane.f32.xlu0 %v1743
        %v1745 = vpop.xlane.xlu0 %1744
        %v1746 = vadd.f32 %v1651, %v1652
        %1747 = vadd.xlane.f32.xlu0 %v1746
        %v1748 = vpop.xlane.xlu0 %1747
        %v1749 = vmul.f32 %v1655, %v1492
        %v1750 = vmul.f32 %v1658, %v1492
        %v1751 = vmul.f32 %v1661, %v1492
        %v1752 = vmul.f32 %v1664, %v1492
        %v1753 = vmul.f32 %v1667, %v1492
        %v1754 = vmul.f32 %v1670, %v1492
        %v1755 = vmul.f32 %v1673, %v1492
        %v1756 = vmul.f32 %v1676, %v1492
        %v1757 = vmul.f32 %v1679, %v1492
        %v1758 = vmul.f32 %v1682, %v1492
        %v1759 = vmul.f32 %v1685, %v1492
        %v1760 = vmul.f32 %v1688, %v1492
        %v1761 = vmul.f32 %v1691, %v1492
        %v1762 = vmul.f32 %v1694, %v1492
        %v1763 = vmul.f32 %v1697, %v1492
        %v1764 = vmul.f32 %v1700, %v1492
        %v1765 = vmul.f32 %v1703, %v1492
        %v1766 = vmul.f32 %v1706, %v1492
        %v1767 = vmul.f32 %v1709, %v1492
        %v1768 = vmul.f32 %v1712, %v1492
        %v1769 = vmul.f32 %v1715, %v1492
        %v1770 = vmul.f32 %v1718, %v1492
        %v1771 = vmul.f32 %v1721, %v1492
        %v1772 = vmul.f32 %v1724, %v1492
        %v1773 = vmul.f32 %v1727, %v1492
        %v1774 = vmul.f32 %v1730, %v1492
        %v1775 = vmul.f32 %v1733, %v1492
        %v1776 = vmul.f32 %v1736, %v1492
        %v1777 = vmul.f32 %v1739, %v1492
        %v1778 = vmul.f32 %v1742, %v1492
        %v1779 = vmul.f32 %v1745, %v1492
        %v1780 = vmul.f32 %v1748, %v1492
        %v1781 = vadd.f32 %v1749, 1e-05
        %v1782 = vadd.f32 %v1750, 1e-05
        %v1783 = vadd.f32 %v1751, 1e-05
        %v1784 = vadd.f32 %v1752, 1e-05
        %v1785 = vadd.f32 %v1753, 1e-05
        %v1786 = vadd.f32 %v1754, 1e-05
        %v1787 = vadd.f32 %v1755, 1e-05
        %v1788 = vadd.f32 %v1756, 1e-05
        %v1789 = vadd.f32 %v1757, 1e-05
        %v1790 = vadd.f32 %v1758, 1e-05
        %v1791 = vadd.f32 %v1759, 1e-05
        %v1792 = vadd.f32 %v1760, 1e-05
        %v1793 = vadd.f32 %v1761, 1e-05
        %v1794 = vadd.f32 %v1762, 1e-05
        %v1795 = vadd.f32 %v1763, 1e-05
        %v1796 = vadd.f32 %v1764, 1e-05
        %v1797 = vadd.f32 %v1765, 1e-05
        %v1798 = vadd.f32 %v1766, 1e-05
        %v1799 = vadd.f32 %v1767, 1e-05
        %v1800 = vadd.f32 %v1768, 1e-05
        %v1801 = vadd.f32 %v1769, 1e-05
        %v1802 = vadd.f32 %v1770, 1e-05
        %v1803 = vadd.f32 %v1771, 1e-05
        %v1804 = vadd.f32 %v1772, 1e-05
        %v1805 = vadd.f32 %v1773, 1e-05
        %v1806 = vadd.f32 %v1774, 1e-05
        %v1807 = vadd.f32 %v1775, 1e-05
        %v1808 = vadd.f32 %v1776, 1e-05
        %v1809 = vadd.f32 %v1777, 1e-05
        %v1810 = vadd.f32 %v1778, 1e-05
        %v1811 = vadd.f32 %v1779, 1e-05
        %v1812 = vadd.f32 %v1780, 1e-05
        %v1813 = vrsqrt.pop %v1781
        %v1814 = vrsqrt.pop %v1782
        %v1815 = vrsqrt.pop %v1783
        %v1816 = vrsqrt.pop %v1784
        %v1817 = vrsqrt.pop %v1785
        %v1818 = vrsqrt.pop %v1786
        %v1819 = vrsqrt.pop %v1787
        %v1820 = vrsqrt.pop %v1788
        %v1821 = vrsqrt.pop %v1789
        %v1822 = vrsqrt.pop %v1790
        %v1823 = vrsqrt.pop %v1791
        %v1824 = vrsqrt.pop %v1792
        %v1825 = vrsqrt.pop %v1793
        %v1826 = vrsqrt.pop %v1794
        %v1827 = vrsqrt.pop %v1795
        %v1828 = vrsqrt.pop %v1796
        %v1829 = vrsqrt.pop %v1797
        %v1830 = vrsqrt.pop %v1798
        %v1831 = vrsqrt.pop %v1799
        %v1832 = vrsqrt.pop %v1800
        %v1833 = vrsqrt.pop %v1801
        %v1834 = vrsqrt.pop %v1802
        %v1835 = vrsqrt.pop %v1803
        %v1836 = vrsqrt.pop %v1804
        %v1837 = vrsqrt.pop %v1805
        %v1838 = vrsqrt.pop %v1806
        %v1839 = vrsqrt.pop %v1807
        %v1840 = vrsqrt.pop %v1808
        %v1841 = vrsqrt.pop %v1809
        %v1842 = vrsqrt.pop %v1810
        %v1843 = vrsqrt.pop %v1811
        %v1844 = vrsqrt.pop %v1812
        %v1845 = vmul.f32 %v1525, %v1813
        %v1846 = vmul.f32 %v1526, %v1813
        %v1847 = vmul.f32 %v1527, %v1814
        %v1848 = vmul.f32 %v1528, %v1814
        %v1849 = vmul.f32 %v1529, %v1815
        %v1850 = vmul.f32 %v1530, %v1815
        %v1851 = vmul.f32 %v1531, %v1816
        %v1852 = vmul.f32 %v1532, %v1816
        %v1853 = vmul.f32 %v1533, %v1817
        %v1854 = vmul.f32 %v1534, %v1817
        %v1855 = vmul.f32 %v1535, %v1818
        %v1856 = vmul.f32 %v1536, %v1818
        %v1857 = vmul.f32 %v1537, %v1819
        %v1858 = vmul.f32 %v1538, %v1819
        %v1859 = vmul.f32 %v1539, %v1820
        %v1860 = vmul.f32 %v1540, %v1820
        %v1861 = vmul.f32 %v1541, %v1821
        %v1862 = vmul.f32 %v1542, %v1821
        %v1863 = vmul.f32 %v1543, %v1822
        %v1864 = vmul.f32 %v1544, %v1822
        %v1865 = vmul.f32 %v1545, %v1823
        %v1866 = vmul.f32 %v1546, %v1823
        %v1867 = vmul.f32 %v1547, %v1824
        %v1868 = vmul.f32 %v1548, %v1824
        %v1869 = vmul.f32 %v1549, %v1825
        %v1870 = vmul.f32 %v1550, %v1825
        %v1871 = vmul.f32 %v1551, %v1826
        %v1872 = vmul.f32 %v1552, %v1826
        %v1873 = vmul.f32 %v1553, %v1827
        %v1874 = vmul.f32 %v1554, %v1827
        %v1875 = vmul.f32 %v1555, %v1828
        %v1876 = vmul.f32 %v1556, %v1828
        %v1877 = vmul.f32 %v1557, %v1829
        %v1878 = vmul.f32 %v1558, %v1829
        %v1879 = vmul.f32 %v1559, %v1830
        %v1880 = vmul.f32 %v1560, %v1830
        %v1881 = vmul.f32 %v1561, %v1831
        %v1882 = vmul.f32 %v1562, %v1831
        %v1883 = vmul.f32 %v1563, %v1832
        %v1884 = vmul.f32 %v1564, %v1832
        %v1885 = vmul.f32 %v1565, %v1833
        %v1886 = vmul.f32 %v1566, %v1833
        %v1887 = vmul.f32 %v1567, %v1834
        %v1888 = vmul.f32 %v1568, %v1834
        %v1889 = vmul.f32 %v1569, %v1835
        %v1890 = vmul.f32 %v1570, %v1835
        %v1891 = vmul.f32 %v1571, %v1836
        %v1892 = vmul.f32 %v1572, %v1836
        %v1893 = vmul.f32 %v1573, %v1837
        %v1894 = vmul.f32 %v1574, %v1837
        %v1895 = vmul.f32 %v1575, %v1838
        %v1896 = vmul.f32 %v1576, %v1838
        %v1897 = vmul.f32 %v1577, %v1839
        %v1898 = vmul.f32 %v1578, %v1839
        %v1899 = vmul.f32 %v1579, %v1840
        %v1900 = vmul.f32 %v1580, %v1840
        %v1901 = vmul.f32 %v1581, %v1841
        %v1902 = vmul.f32 %v1582, %v1841
        %v1903 = vmul.f32 %v1583, %v1842
        %v1904 = vmul.f32 %v1584, %v1842
        %v1905 = vmul.f32 %v1585, %v1843
        %v1906 = vmul.f32 %v1586, %v1843
        %v1907 = vmul.f32 %v1587, %v1844
        %v1908 = vmul.f32 %v1588, %v1844
        %v1909 = vld [vmem:[%s5] sm:$0x3]
        %v1911 = vlaneseq
        %v1912 = vshrl.u32 %v1911, 7
        %v1913 = vsub.s32 0, %v1912
        %v1914 = vrot.slane %v1909, %v1913
        %v1915 = vlaneseq
        %v1916 = vshrl.u32 %v1915, 7
        %v1917 = vsub.s32 1, %v1916
        %v1918 = vrot.slane %v1909, %v1917
        %v1921 = vmul.f32 %v1845, %v1914
        %v1922 = vmul.f32 %v1846, %v1918
        %v1923 = vmul.f32 %v1847, %v1914
        %v1924 = vmul.f32 %v1848, %v1918
        %v1925 = vmul.f32 %v1849, %v1914
        %v1926 = vmul.f32 %v1850, %v1918
        %v1927 = vmul.f32 %v1851, %v1914
        %v1928 = vmul.f32 %v1852, %v1918
        %v1929 = vmul.f32 %v1853, %v1914
        %v1930 = vmul.f32 %v1854, %v1918
        %v1931 = vmul.f32 %v1855, %v1914
        %v1932 = vmul.f32 %v1856, %v1918
        %v1933 = vmul.f32 %v1857, %v1914
        %v1934 = vmul.f32 %v1858, %v1918
        %v1935 = vmul.f32 %v1859, %v1914
        %v1936 = vmul.f32 %v1860, %v1918
        %v1937 = vmul.f32 %v1861, %v1914
        %v1938 = vmul.f32 %v1862, %v1918
        %v1939 = vmul.f32 %v1863, %v1914
        %v1940 = vmul.f32 %v1864, %v1918
        %v1941 = vmul.f32 %v1865, %v1914
        %v1942 = vmul.f32 %v1866, %v1918
        %v1943 = vmul.f32 %v1867, %v1914
        %v1944 = vmul.f32 %v1868, %v1918
        %v1945 = vmul.f32 %v1869, %v1914
        %v1946 = vmul.f32 %v1870, %v1918
        %v1947 = vmul.f32 %v1871, %v1914
        %v1948 = vmul.f32 %v1872, %v1918
        %v1949 = vmul.f32 %v1873, %v1914
        %v1950 = vmul.f32 %v1874, %v1918
        %v1951 = vmul.f32 %v1875, %v1914
        %v1952 = vmul.f32 %v1876, %v1918
        %v1953 = vmul.f32 %v1877, %v1914
        %v1954 = vmul.f32 %v1878, %v1918
        %v1955 = vmul.f32 %v1879, %v1914
        %v1956 = vmul.f32 %v1880, %v1918
        %v1957 = vmul.f32 %v1881, %v1914
        %v1958 = vmul.f32 %v1882, %v1918
        %v1959 = vmul.f32 %v1883, %v1914
        %v1960 = vmul.f32 %v1884, %v1918
        %v1961 = vmul.f32 %v1885, %v1914
        %v1962 = vmul.f32 %v1886, %v1918
        %v1963 = vmul.f32 %v1887, %v1914
        %v1964 = vmul.f32 %v1888, %v1918
        %v1965 = vmul.f32 %v1889, %v1914
        %v1966 = vmul.f32 %v1890, %v1918
        %v1967 = vmul.f32 %v1891, %v1914
        %v1968 = vmul.f32 %v1892, %v1918
        %v1969 = vmul.f32 %v1893, %v1914
        %v1970 = vmul.f32 %v1894, %v1918
        %v1971 = vmul.f32 %v1895, %v1914
        %v1972 = vmul.f32 %v1896, %v1918
        %v1973 = vmul.f32 %v1897, %v1914
        %v1974 = vmul.f32 %v1898, %v1918
        %v1975 = vmul.f32 %v1899, %v1914
        %v1976 = vmul.f32 %v1900, %v1918
        %v1977 = vmul.f32 %v1901, %v1914
        %v1978 = vmul.f32 %v1902, %v1918
        %v1979 = vmul.f32 %v1903, %v1914
        %v1980 = vmul.f32 %v1904, %v1918
        %v1981 = vmul.f32 %v1905, %v1914
        %v1982 = vmul.f32 %v1906, %v1918
        %v1983 = vmul.f32 %v1907, %v1914
        %v1984 = vmul.f32 %v1908, %v1918
        %v1985 = vld [vmem:[%s6] sm:$0x3]
        %v1987 = vlaneseq
        %v1988 = vshrl.u32 %v1987, 7
        %v1989 = vsub.s32 0, %v1988
        %v1990 = vrot.slane %v1985, %v1989
        %v1991 = vlaneseq
        %v1992 = vshrl.u32 %v1991, 7
        %v1993 = vsub.s32 1, %v1992
        %v1994 = vrot.slane %v1985, %v1993
        %v1997 = vadd.f32 %v1921, %v1990
        %v1998 = vadd.f32 %v1922, %v1994
        %v1999 = vadd.f32 %v1923, %v1990
        %v2000 = vadd.f32 %v1924, %v1994
        %v2001 = vadd.f32 %v1925, %v1990
        %v2002 = vadd.f32 %v1926, %v1994
        %v2003 = vadd.f32 %v1927, %v1990
        %v2004 = vadd.f32 %v1928, %v1994
        %v2005 = vadd.f32 %v1929, %v1990
        %v2006 = vadd.f32 %v1930, %v1994
        %v2007 = vadd.f32 %v1931, %v1990
        %v2008 = vadd.f32 %v1932, %v1994
        %v2009 = vadd.f32 %v1933, %v1990
        %v2010 = vadd.f32 %v1934, %v1994
        %v2011 = vadd.f32 %v1935, %v1990
        %v2012 = vadd.f32 %v1936, %v1994
        %v2013 = vadd.f32 %v1937, %v1990
        %v2014 = vadd.f32 %v1938, %v1994
        %v2015 = vadd.f32 %v1939, %v1990
        %v2016 = vadd.f32 %v1940, %v1994
        %v2017 = vadd.f32 %v1941, %v1990
        %v2018 = vadd.f32 %v1942, %v1994
        %v2019 = vadd.f32 %v1943, %v1990
        %v2020 = vadd.f32 %v1944, %v1994
        %v2021 = vadd.f32 %v1945, %v1990
        %v2022 = vadd.f32 %v1946, %v1994
        %v2023 = vadd.f32 %v1947, %v1990
        %v2024 = vadd.f32 %v1948, %v1994
        %v2025 = vadd.f32 %v1949, %v1990
        %v2026 = vadd.f32 %v1950, %v1994
        %v2027 = vadd.f32 %v1951, %v1990
        %v2028 = vadd.f32 %v1952, %v1994
        %v2029 = vadd.f32 %v1953, %v1990
        %v2030 = vadd.f32 %v1954, %v1994
        %v2031 = vadd.f32 %v1955, %v1990
        %v2032 = vadd.f32 %v1956, %v1994
        %v2033 = vadd.f32 %v1957, %v1990
        %v2034 = vadd.f32 %v1958, %v1994
        %v2035 = vadd.f32 %v1959, %v1990
        %v2036 = vadd.f32 %v1960, %v1994
        %v2037 = vadd.f32 %v1961, %v1990
        %v2038 = vadd.f32 %v1962, %v1994
        %v2039 = vadd.f32 %v1963, %v1990
        %v2040 = vadd.f32 %v1964, %v1994
        %v2041 = vadd.f32 %v1965, %v1990
        %v2042 = vadd.f32 %v1966, %v1994
        %v2043 = vadd.f32 %v1967, %v1990
        %v2044 = vadd.f32 %v1968, %v1994
        %v2045 = vadd.f32 %v1969, %v1990
        %v2046 = vadd.f32 %v1970, %v1994
        %v2047 = vadd.f32 %v1971, %v1990
        %v2048 = vadd.f32 %v1972, %v1994
        %v2049 = vadd.f32 %v1973, %v1990
        %v2050 = vadd.f32 %v1974, %v1994
        %v2051 = vadd.f32 %v1975, %v1990
        %v2052 = vadd.f32 %v1976, %v1994
        %v2053 = vadd.f32 %v1977, %v1990
        %v2054 = vadd.f32 %v1978, %v1994
        %v2055 = vadd.f32 %v1979, %v1990
        %v2056 = vadd.f32 %v1980, %v1994
        %v2057 = vadd.f32 %v1981, %v1990
        %v2058 = vadd.f32 %v1982, %v1994
        %v2059 = vadd.f32 %v1983, %v1990
        %v2060 = vadd.f32 %v1984, %v1994
        %2061 = vst [vmem:[%s333] sm:$0xff] %v1997
        %2062 = vst [vmem:[%s333 + $0x8] sm:$0xff] %v1998
        %2063 = vst [vmem:[%s333 + $0x10] sm:$0xff] %v1999
        %2064 = vst [vmem:[%s333 + $0x18] sm:$0xff] %v2000
        %2065 = vst [vmem:[%s333 + $0x20] sm:$0xff] %v2001
        %2066 = vst [vmem:[%s333 + $0x28] sm:$0xff] %v2002
        %2067 = vst [vmem:[%s333 + $0x30] sm:$0xff] %v2003
        %2068 = vst [vmem:[%s333 + $0x38] sm:$0xff] %v2004
        %2069 = vst [vmem:[%s333 + $0x40] sm:$0xff] %v2005
        %2070 = vst [vmem:[%s333 + $0x48] sm:$0xff] %v2006
        %2071 = vst [vmem:[%s333 + $0x50] sm:$0xff] %v2007
        %2072 = vst [vmem:[%s333 + $0x58] sm:$0xff] %v2008
        %2073 = vst [vmem:[%s333 + $0x60] sm:$0xff] %v2009
        %2074 = vst [vmem:[%s333 + $0x68] sm:$0xff] %v2010
        %2075 = vst [vmem:[%s333 + $0x70] sm:$0xff] %v2011
        %2076 = vst [vmem:[%s333 + $0x78] sm:$0xff] %v2012
        %2077 = vst [vmem:[%s333 + $0x80] sm:$0xff] %v2013
        %2078 = vst [vmem:[%s333 + $0x88] sm:$0xff] %v2014
        %2079 = vst [vmem:[%s333 + $0x90] sm:$0xff] %v2015
        %2080 = vst [vmem:[%s333 + $0x98] sm:$0xff] %v2016
        %2081 = vst [vmem:[%s333 + $0xa0] sm:$0xff] %v2017
        %2082 = vst [vmem:[%s333 + $0xa8] sm:$0xff] %v2018
        %2083 = vst [vmem:[%s333 + $0xb0] sm:$0xff] %v2019
        %2084 = vst [vmem:[%s333 + $0xb8] sm:$0xff] %v2020
        %2085 = vst [vmem:[%s333 + $0xc0] sm:$0xff] %v2021
        %2086 = vst [vmem:[%s333 + $0xc8] sm:$0xff] %v2022
        %2087 = vst [vmem:[%s333 + $0xd0] sm:$0xff] %v2023
        %2088 = vst [vmem:[%s333 + $0xd8] sm:$0xff] %v2024
        %2089 = vst [vmem:[%s333 + $0xe0] sm:$0xff] %v2025
        %2090 = vst [vmem:[%s333 + $0xe8] sm:$0xff] %v2026
        %2091 = vst [vmem:[%s333 + $0xf0] sm:$0xff] %v2027
        %2092 = vst [vmem:[%s333 + $0xf8] sm:$0xff] %v2028
        %2093 = vst [vmem:[%s333 + $0x100] sm:$0xff] %v2029
        %2094 = vst [vmem:[%s333 + $0x108] sm:$0xff] %v2030
        %2095 = vst [vmem:[%s333 + $0x110] sm:$0xff] %v2031
        %2096 = vst [vmem:[%s333 + $0x118] sm:$0xff] %v2032
        %2097 = vst [vmem:[%s333 + $0x120] sm:$0xff] %v2033
        %2098 = vst [vmem:[%s333 + $0x128] sm:$0xff] %v2034
        %2099 = vst [vmem:[%s333 + $0x130] sm:$0xff] %v2035
        %2100 = vst [vmem:[%s333 + $0x138] sm:$0xff] %v2036
        %2101 = vst [vmem:[%s333 + $0x140] sm:$0xff] %v2037
        %2102 = vst [vmem:[%s333 + $0x148] sm:$0xff] %v2038
        %2103 = vst [vmem:[%s333 + $0x150] sm:$0xff] %v2039
        %2104 = vst [vmem:[%s333 + $0x158] sm:$0xff] %v2040
        %2105 = vst [vmem:[%s333 + $0x160] sm:$0xff] %v2041
        %2106 = vst [vmem:[%s333 + $0x168] sm:$0xff] %v2042
        %2107 = vst [vmem:[%s333 + $0x170] sm:$0xff] %v2043
        %2108 = vst [vmem:[%s333 + $0x178] sm:$0xff] %v2044
        %2109 = vst [vmem:[%s333 + $0x180] sm:$0xff] %v2045
        %2110 = vst [vmem:[%s333 + $0x188] sm:$0xff] %v2046
        %2111 = vst [vmem:[%s333 + $0x190] sm:$0xff] %v2047
        %2112 = vst [vmem:[%s333 + $0x198] sm:$0xff] %v2048
        %2113 = vst [vmem:[%s333 + $0x1a0] sm:$0xff] %v2049
        %2114 = vst [vmem:[%s333 + $0x1a8] sm:$0xff] %v2050
        %2115 = vst [vmem:[%s333 + $0x1b0] sm:$0xff] %v2051
        %2116 = vst [vmem:[%s333 + $0x1b8] sm:$0xff] %v2052
        %2117 = vst [vmem:[%s333 + $0x1c0] sm:$0xff] %v2053
        %2118 = vst [vmem:[%s333 + $0x1c8] sm:$0xff] %v2054
        %2119 = vst [vmem:[%s333 + $0x1d0] sm:$0xff] %v2055
        %2120 = vst [vmem:[%s333 + $0x1d8] sm:$0xff] %v2056
        %2121 = vst [vmem:[%s333 + $0x1e0] sm:$0xff] %v2057
        %2122 = vst [vmem:[%s333 + $0x1e8] sm:$0xff] %v2058
        %2123 = vst [vmem:[%s333 + $0x1f0] sm:$0xff] %v2059
        %2124 = vst [vmem:[%s333 + $0x1f8] sm:$0xff] %v2060
        %s2125 = sand.u32 %s185, 1
        %s2126 = scalar_lea.sflag [#allocation4], %s2125
        %s2127 = sand.u32 %s185, 1
        %s2128 = smul.addr %s2127, 512
        %s2129 = scalar_lea.vmem [#allocation8], %s2128
        // Predicated region
        $region61: #{tpu_custom_call.1} parent=47 // pred_check
          %p2130 = pneg %p195
        $region62: #{tpu_custom_call.1} parent=47 // pred_check_branch
          %2132 = sbr.rel (%p2130) target = $region64
        $region63: #{tpu_custom_call.1} parent=47 // pred_region
          %s2133 = smul.u32 32, %s25
          %s2134 = ssub.s32 63, %s2133
          %p2135 = scmp.lt.s32.totalorder %s2134, 32
          %s2136 = scalar_select %p2135, %s2134, 32
          %s2137 = smul.u32 128, %s2136
          %s2138 = smul.u32 %s2137, 2
          %s2140 = ssub.s32 8192, %s2138
          %2141 = vsyncadd %s2126, %s2140
          %p2142 = scmp.ne.s32.totalorder 0, %s2138
          %s2143 = smul.addr %s2133, 2
          %s2144 = smul.addr %s2143, 128
          %s2145 = scalar_lea.hbm %s7, %s2144
          %s2146 = smul.u32 16, %s2136
          %s2147 = sshll.u32 %s2129, 4
          %s2148 = int_to_ptr.vmem [resolvable:$true] %s2147
          %s2149 = sshll.u32 %s2146, 4
          %2153 = dma.vmem_to_hbm [thread:$0]  (%p2142), %s2148, %s2149, %s2145, %s2126, 256, 256, 16
        $region64: #{tpu_custom_call.1} parent=47 // pred_fallthru
          _
      $region48: #{tpu_custom_call.1} parent=5 // pred_fallthru
        _
      %p2154 = scmp.le.s32.totalorder 2, %s20
      // Predicated region
      $region65: #{tpu_custom_call.1} parent=5 // pred_check
        %p2155 = pneg %p2154
      $region66: #{tpu_custom_call.1} parent=5 // pred_check_branch
        %2157 = sbr.rel (%p2155) target = $region68
      $region67: #{tpu_custom_call.1} parent=5 // pred_region
        %s2158 = ssub.s32 %s20, 2
        // Predicated region
        $region69: #{tpu_custom_call.1} parent=67 // pred_check
          %p2159 = pneg %p201
        $region70: #{tpu_custom_call.1} parent=67 // pred_check_branch
          %2161 = sbr.rel (%p2159) target = $region72
        $region71: #{tpu_custom_call.1} parent=67 // pred_region
          %s2162 = sand.u32 %s186, 1
          %s2163 = scalar_lea.sflag [#allocation4], %s2162
          %s2164 = sand.u32 %s186, 1
          %s2165 = smul.addr %s2164, 512
          %s2166 = scalar_lea.vmem [#allocation8], %s2165
          %2167 = dma.done %s2163, 8192
        $region72: #{tpu_custom_call.1} parent=67 // pred_fallthru
          _
      $region68: #{tpu_custom_call.1} parent=5 // pred_fallthru
        _
    $region6: #{tpu_custom_call.1} parent=1 // loop_footer
      %s24 = sadd.s32 1, %s20
    $region7: #{tpu_custom_call.1} parent=1 // loop_footer_branch
      %19 = sbr.rel target = $region3
    $region8: #{tpu_custom_call.1} parent=1 // loop_exit
      _
    %2168 = vsyncpa [#allocation3], 1
    %s2169 = scalar_lea.sflag [#allocation3], 1
    %2170 = vsyncpa %s2169, 1
    %2171 = vsyncpa [#allocation6], 1
    %2172 = vsyncpa [#allocation4], 1
    %s2173 = scalar_lea.sflag [#allocation4], 1
    %2174 = vsyncpa %s2173, 1

</llo_original>
